<compile_context>
chip_gen: v5e
topology: v5e:2x2
jax: 0.10.0
libtpu: 0.0.40
codegen_flags: <defaults>
</compile_context>

<pallas_src>
import math
import functools

import jax
import jax.numpy as jnp
from jax import lax
from jax.experimental import pallas as pl
from jax.experimental.pallas import tpu as pltpu


def _round_up(x, m):
    return ((x + m - 1) // m) * m


# ----------------------------------------------------------------------------
# Pallas kernel: one (batch, query-tile, memory-tile) step of the memory read
# ----------------------------------------------------------------------------
def _read_memory_kernel(n_valid_ref, mk_ref, ms_ref, q_ref, bsq_ref, mv_ref,
                        out_ref, m_ref, l_ref, *, apply_mask):
    """Shapes inside the kernel (leading block dim of 1 stripped via [0]):

      n_valid_ref: (1,)        i32   SMEM: true (unpadded) memory length
      mk_ref : (1, CK, TN)     f32   memory key, native channel-major
      ms_ref : (1, 1,  TN)     f32   memory shrinkage, pre-scaled by 1/sqrt(CK)
      q_ref  : (1, TM, 2CK)    f32   packed query rows [qe ; qk*qe]
      bsq_ref: (1, TM, 1)      f32   per-pixel sum_c qe*qk^2
      mv_ref : (1, TN, C)      bf16  memory value, pixel-major (C = no*CV)
      out_ref: (1, TM, C)      f32   readout accumulator
      m_ref  : (TM, 1)         f32   online-softmax running max
      l_ref  : (TM, 1)         f32   online-softmax running denominator
    """
    ni = pl.program_id(2)
    tn = mk_ref.shape[-1]

    @pl.when(ni == 0)
    def _init():
        m_ref[...] = jnp.full_like(m_ref, -1e30)
        l_ref[...] = jnp.zeros_like(l_ref)
        out_ref[...] = jnp.zeros_like(out_ref)

    # --- anisotropic-L2 similarity: one K = 2*CK MXU dot + rank-1 VPU term --
    # sim[m, n] = s[n] * (-sum_c mk^2 qe + 2 sum_c mk qk qe) - b_sq[m] * s[n]
    mk = mk_ref[0]                                     # (CK, TN) f32
    s = ms_ref[0]                                      # (1,  TN) f32 (shrink/sqrt(CK))
    lhs = jnp.concatenate([-(mk * mk) * s, (2.0 * mk) * s], axis=0)   # (2CK, TN)

    sim = jnp.dot(q_ref[0], lhs,
                  preferred_element_type=jnp.float32)  # (TM, TN) f32
    sim = sim - bsq_ref[0] * s                         # outer-product subtract

    if apply_mask:
        # mask the zero-padded memory columns (only emitted when padding exists)
        col = ni * tn + lax.broadcasted_iota(jnp.int32, (1, tn), 1)
        sim = jnp.where(col < n_valid_ref[0], sim, -1e30)

    # --- online softmax over the memory axis --------------------------------
    m_prev = m_ref[...]                                            # (TM, 1)
    m_new = jnp.maximum(m_prev, jnp.max(sim, axis=-1, keepdims=True))
    alpha = jnp.exp(m_prev - m_new)                                # (TM, 1)
    p = jnp.exp(sim - m_new)                                       # (TM, TN) f32
    l_ref[...] = alpha * l_ref[...] + jnp.sum(p, axis=-1, keepdims=True)
    m_ref[...] = m_new

    # --- readout: (TM,TN) @ (TN,C), bf16 operands, f32 accumulation ---------
    mv = mv_ref[0]                                                 # (TN, C) bf16
    pv = jnp.dot(p.astype(mv.dtype), mv,
                 preferred_element_type=jnp.float32)               # (TM, C) f32
    out_ref[0] = alpha * out_ref[0] + pv

    @pl.when(ni == pl.num_programs(2) - 1)
    def _finalize():
        out_ref[0] = out_ref[0] * pl.reciprocal(l_ref[...], approx=True)


def _read_memory_pallas(n_valid, mk, ms, q_packed, bsq, mv, *, apply_mask,
                        tm, tn):
    """mk:(B,CK,Np) ms:(B,1,Np) q:(B,Mp,2CK) bsq:(B,Mp,1) mv:(B,Np,C) -> (B,Mp,C)."""
    B, CK, n_pad = mk.shape
    _, m_pad, K = q_packed.shape
    C = mv.shape[2]
    assert K == 2 * CK
    assert m_pad % tm == 0 and n_pad % tn == 0

    kernel = functools.partial(_read_memory_kernel, apply_mask=apply_mask)

    # VMEM budget: per-block bytes x double buffering + margin, capped for v7x.
    blk_bytes = (CK * tn * 4 + tn * 4 + tm * K * 4 + tm * 4
                 + tn * C * 2 + tm * C * 4)
    vmem_limit = min(64 * 1024 * 1024, max(8 * 1024 * 1024,
                                           2 * blk_bytes + 4 * 1024 * 1024))

    return pl.pallas_call(
        kernel,
        out_shape=jax.ShapeDtypeStruct((B, m_pad, C), jnp.float32),
        grid_spec=pltpu.PrefetchScalarGridSpec(
            num_scalar_prefetch=1,
            grid=(B, m_pad // tm, n_pad // tn),
            in_specs=[
                pl.BlockSpec((1, CK, tn), lambda b, mi, ni, nv: (b, 0, ni)),
                pl.BlockSpec((1, 1, tn), lambda b, mi, ni, nv: (b, 0, ni)),
                pl.BlockSpec((1, tm, K), lambda b, mi, ni, nv: (b, mi, 0)),
                pl.BlockSpec((1, tm, 1), lambda b, mi, ni, nv: (b, mi, 0)),
                pl.BlockSpec((1, tn, C), lambda b, mi, ni, nv: (b, ni, 0)),
            ],
            out_specs=pl.BlockSpec((1, tm, C), lambda b, mi, ni, nv: (b, mi, 0)),
            scratch_shapes=[
                pltpu.VMEM((tm, 1), jnp.float32),    # running max
                pltpu.VMEM((tm, 1), jnp.float32),    # running denominator
            ],
        ),
        compiler_params=pltpu.CompilerParams(
            dimension_semantics=("parallel", "parallel", "arbitrary"),
            vmem_limit_bytes=vmem_limit,
        ),
    )(n_valid, mk, ms, q_packed, bsq, mv)


# ----------------------------------------------------------------------------
# XMem module (JAX), forward dispatch like the torch module
# ----------------------------------------------------------------------------
class XMemPallas:
    def __init__(self, config):
        # init_hyperparameters (no checkpoint): defaults overridden by config
        self.key_dim = config.get('key_dim', 64)
        self.value_dim = config.get('value_dim', 512)
        self.hidden_dim = config.get('hidden_dim', 64)
        self.disable_hidden = self.hidden_dim <= 0
        self.single_object = config.get('single_object', False)
        self.masked_8 = 2
        self.masked_4 = 4
        # TODO(synk): KeyEncoder / ValueEncoder / KeyProjection / Decoder
        # parameters (ResNet backbones) are external submodules not defined in
        # the provided source; read_memory itself is parameter-free.

    def read_memory(self, query_key, query_selection, memory_key,
                    memory_shrinkage, memory_value, masked, *, tm=512, tn=2048):
        """
        query_key       : B * CK * H * W
        query_selection : B * CK * H * W
        memory_key      : B * CK * T * H * W
        memory_shrinkage: B * 1  * T * H * W
        memory_value    : B * num_objects * CV * T * H * W
        """
        B, num_objects, CV, T, H, W = memory_value.shape
        CK = memory_key.shape[1]
        assert CV == self.value_dim // masked, (CV, self.value_dim, masked)
        assert tm % 128 == 0 and tn % 128 == 0
        N = T * H * W
        M = H * W
        C = num_objects * CV

        # --- tile selection --------------------------------------------------
        tm = min(tm, _round_up(M, 128))
        tn = min(tn, _round_up(N, 128))
        # v7x megacore: keep >= 2 blocks on the parallel grid axes so neither
        # TensorCore idles (only matters when B == 1 and M spans one tile).
        if B * (_round_up(M, tm) // tm) < 2:
            tm = max(128, min(tm, _round_up((M + 1) // 2, 128)))
        m_pad = _round_up(M, tm)
        n_pad = _round_up(N, tn)
        # Bucket the padded memory length (XMem's memory grows every frame) to
        # multiples of 2 tiles once it spans several tiles; the true length is
        # passed via SMEM so recompiles only happen at bucket boundaries.
        if n_pad > 2 * tn:
            n_pad = _round_up(n_pad, 2 * tn)
        apply_mask = (n_pad != N)

        scale = 1.0 / math.sqrt(CK)

        # --- key / shrinkage: native channel-major, zero-padded along N -----
        mk = memory_key.reshape(B, CK, N)
        ms = memory_shrinkage.reshape(B, 1, N) * scale   # fold 1/sqrt(CK) here
        if n_pad != N:
            mk = jnp.pad(mk, ((0, 0), (0, 0), (0, n_pad - N)))
            ms = jnp.pad(ms, ((0, 0), (0, 0), (0, n_pad - N)))

        # --- query side: packed rows [qe ; qk*qe], rank-1 term separate -----
        qk = query_key.reshape(B, CK, M)
        qe = query_selection.reshape(B, CK, M)
        q_packed = jnp.concatenate([qe, qk * qe], axis=1)            # (B,2CK,M)
        bsq = jnp.sum(qe * qk * qk, axis=1, keepdims=True)           # (B,1,M)
        if m_pad != M:
            q_packed = jnp.pad(q_packed, ((0, 0), (0, 0), (0, m_pad - M)))
            bsq = jnp.pad(bsq, ((0, 0), (0, 0), (0, m_pad - M)))
        q_packed = jnp.transpose(q_packed, (0, 2, 1))                # (B,Mp,2CK)
        bsq = jnp.transpose(bsq, (0, 2, 1))                          # (B,Mp,1)

        # --- value side: pixel-major (B, N, C), bf16 (dominant operand) -----
        mv = jnp.transpose(memory_value.reshape(B, C, N), (0, 2, 1))
        mv = mv.astype(jnp.bfloat16)                                 # (B,N,C)
        if n_pad != N:
            mv = jnp.pad(mv, ((0, 0), (0, n_pad - N), (0, 0)))

        n_valid = jnp.array([N], dtype=jnp.int32)

        out = _read_memory_pallas(n_valid, mk, ms, q_packed, bsq, mv,
                                  apply_mask=apply_mask, tm=tm, tn=tn)
        out = out[:, :M, :]                                          # drop pad
        out = jnp.transpose(out, (0, 2, 1))                          # (B,C,M)
        return out.reshape(B, num_objects, CV, H, W)

    def forward(self, mode, *args, **kwargs):
        if mode == 'read_memory':
            return self.read_memory(*args, **kwargs)
        elif mode in ('encode_key', 'encode_value', 'segment'):
            # TODO(synk): requires ResNet encoders / decoder / ToMe matching.
            raise NotImplementedError(f'{mode} not translated to Pallas')
        else:
            raise NotImplementedError

    __call__ = forward


# ----------------------------------------------------------------------------
# Pure-JAX reference (mirror of memory_util.get_affinity + readout)
# ----------------------------------------------------------------------------
def _read_memory_ref(query_key, query_selection, memory_key, memory_shrinkage,
                     memory_value, value_dim, masked):
    B, no, CV, T, H, W = memory_value.shape
    CK = memory_key.shape[1]
    N, M = T * H * W, H * W
    mk = memory_key.reshape(B, CK, N)
    ms = memory_shrinkage.reshape(B, 1, N)
    qk = query_key.reshape(B, CK, M)
    qe = query_selection.reshape(B, CK, M)
    mkT = jnp.transpose(mk, (0, 2, 1))                    # (B,N,CK)
    a_sq = jnp.einsum('bnc,bcm->bnm', mkT ** 2, qe)
    two_ab = 2.0 * jnp.einsum('bnc,bcm->bnm', mkT, qk * qe)
    b_sq = jnp.sum(qe * qk ** 2, axis=1, keepdims=True)   # (B,1,M)
    sim = (-a_sq + two_ab - b_sq) * jnp.transpose(ms, (0, 2, 1)) / math.sqrt(CK)
    sim = sim - jnp.max(sim, axis=1, keepdims=True)
    e = jnp.exp(sim)
    aff = e / jnp.sum(e, axis=1, keepdims=True)           # (B,N,M)
    mv = memory_value.reshape(B, no * CV, N)
    mem = jnp.einsum('bcn,bnm->bcm', mv, aff)
    return mem.reshape(B, no, value_dim // masked, H, W)


# ----------------------------------------------------------------------------
if __name__ == "__main__":
    # Small shapes that exercise tiling, edge padding/masking and the online
    # softmax accumulation: N = 432 -> 4 memory tiles of 128 (last one padded),
    # M = 144 -> 2 query tiles of 128 (last one padded).
    B, num_objects = 2, 2
    CK = 16                 # key_dim
    value_dim = 32
    masked = 2
    CV = value_dim // masked  # 16
    T, H, W = 3, 12, 12

    config = dict(key_dim=CK, value_dim=value_dim, hidden_dim=16)
    model = XMemPallas(config)

    key = jax.random.PRNGKey(0)
    k1, k2, k3, k4, k5 = jax.random.split(key, 5)
    query_key = jax.random.normal(k1, (B, CK, H, W), jnp.float32)
    # selection in (0,1) and shrinkage in (1,16), matching how XMem makes them
    query_selection = jax.nn.sigmoid(
        jax.random.normal(k2, (B, CK, H, W), jnp.float32))
    memory_key = jax.random.normal(k3, (B, CK, T, H, W), jnp.float32)
    memory_shrinkage = 1.0 + jax.nn.sigmoid(
        jax.random.normal(k4, (B, 1, T, H, W), jnp.float32)) * 15.0
    memory_value = jax.random.normal(
        k5, (B, num_objects, CV, T, H, W), jnp.float32)

    ref = _read_memory_ref(query_key, query_selection, memory_key,
                           memory_shrinkage, memory_value, value_dim, masked)

    # Small tiles: multi-tile online softmax + last-tile padding mask.
    out_small = model('read_memory', query_key, query_selection, memory_key,
                      memory_shrinkage, memory_value, masked, tm=128, tn=128)
    out_small = jax.block_until_ready(out_small)
    # Default (large) tiles clamped to the problem size: single-tile path.
    out_big = model('read_memory', query_key, query_selection, memory_key,
                    memory_shrinkage, memory_value, masked)
    out_big = jax.block_until_ready(out_big)

    assert out_small.shape == (B, num_objects, CV, H, W), out_small.shape
    assert out_big.shape == (B, num_objects, CV, H, W), out_big.shape
    err_small = float(jnp.max(jnp.abs(out_small - ref)))
    err_big = float(jnp.max(jnp.abs(out_big - ref)))
    # Readout matmul uses bf16 operands (f32 accumulation) + approx reciprocal,
    # so compare against the all-f32 reference with a matching tolerance.
    assert jnp.allclose(out_small, ref, rtol=2e-2, atol=2e-2), err_small
    assert jnp.allclose(out_big, ref, rtol=2e-2, atol=2e-2), err_big

    print("KERNEL_OK")
</pallas_src>

<mosaic_0001>
module attributes {stable_mosaic.version = 11 : i64} {
  func.func @_read_memory_kernel(%arg0: i32, %arg1: i32, %arg2: i32, %arg3: memref<1xi32, #tpu.memory_space<smem>>, %arg4: memref<1x16x128xf32, #tpu.memory_space<vmem>>, %arg5: memref<1x1x128xf32, #tpu.memory_space<vmem>>, %arg6: memref<1x128x32xf32, #tpu.memory_space<vmem>>, %arg7: memref<1x128x1xf32, #tpu.memory_space<vmem>>, %arg8: memref<1x128x32xbf16, #tpu.memory_space<vmem>>, %arg9: memref<1x128x32xf32, #tpu.memory_space<vmem>>, %arg10: memref<128x1xf32, #tpu.memory_space<vmem>>, %arg11: memref<128x1xf32, #tpu.memory_space<vmem>>) attributes {dimension_semantics = [#tpu.dimension_semantics<parallel>, #tpu.dimension_semantics<parallel>, #tpu.dimension_semantics<arbitrary>], iteration_bounds = array<i64: 2, 2, 4>, scalar_prefetch = 1 : i64, scratch_operands = 2 : i64, tpu.core_type = #tpu.core_type<tc>, window_params = [{transform_indices = @transform_0, window_bounds = array<i64: 1, 16, 128>}, {transform_indices = @transform_1, window_bounds = array<i64: 1, 1, 128>}, {transform_indices = @transform_2, window_bounds = array<i64: 1, 128, 32>}, {transform_indices = @transform_3, window_bounds = array<i64: 1, 128, 1>}, {transform_indices = @transform_4, window_bounds = array<i64: 1, 128, 32>}, {transform_indices = @transform_5, window_bounds = array<i64: 1, 128, 32>}]} {
    %c0_i32 = arith.constant 0 : i32
    %0 = arith.cmpi eq, %arg2, %c0_i32 : i32
    %1 = arith.extui %0 : i1 to i32
    %c0_i32_0 = arith.constant 0 : i32
    %2 = arith.cmpi ne, %1, %c0_i32_0 : i32
    scf.if %2 {
      %cst_37 = arith.constant -1.000000e+30 : f32
      %68 = vector.broadcast %cst_37 : f32 to vector<128x1xf32>
      %c0_38 = arith.constant 0 : index
      %c0_39 = arith.constant 0 : index
      %69 = vector.load %arg10[%c0_38, %c0_39] : memref<128x1xf32, #tpu.memory_space<vmem>>, vector<128x1xf32>
      tpu.vector_store %arg10[%c0_38, %c0_39], %68 {strides = array<i32>} : memref<128x1xf32, #tpu.memory_space<vmem>>, vector<128x1xf32>,
      %cst_40 = arith.constant 0.000000e+00 : f32
      %70 = vector.broadcast %cst_40 : f32 to vector<128x1xf32>
      %c0_41 = arith.constant 0 : index
      %c0_42 = arith.constant 0 : index
      %71 = vector.load %arg11[%c0_41, %c0_42] : memref<128x1xf32, #tpu.memory_space<vmem>>, vector<128x1xf32>
      tpu.vector_store %arg11[%c0_41, %c0_42], %70 {strides = array<i32>} : memref<128x1xf32, #tpu.memory_space<vmem>>, vector<128x1xf32>,
      %cst_43 = arith.constant 0.000000e+00 : f32
      %72 = vector.broadcast %cst_43 : f32 to vector<1x128x32xf32>
      %c0_44 = arith.constant 0 : index
      %c0_45 = arith.constant 0 : index
      %c0_46 = arith.constant 0 : index
      %73 = vector.load %arg9[%c0_44, %c0_45, %c0_46] : memref<1x128x32xf32, #tpu.memory_space<vmem>>, vector<1x128x32xf32>
      tpu.vector_store %arg9[%c0_44, %c0_45, %c0_46], %72 {strides = array<i32>} : memref<1x128x32xf32, #tpu.memory_space<vmem>>, vector<1x128x32xf32>,
    } else {
    }
    %c0 = arith.constant 0 : index
    %c0_1 = arith.constant 0 : index
    %c0_2 = arith.constant 0 : index
    %3 = vector.load %arg4[%c0, %c0_1, %c0_2] : memref<1x16x128xf32, #tpu.memory_space<vmem>>, vector<1x16x128xf32>
    %4 = vector.shape_cast %3 : vector<1x16x128xf32> to vector<16x128xf32>
    %c0_3 = arith.constant 0 : index
    %c0_4 = arith.constant 0 : index
    %c0_5 = arith.constant 0 : index
    %5 = vector.load %arg5[%c0_3, %c0_4, %c0_5] : memref<1x1x128xf32, #tpu.memory_space<vmem>>, vector<1x1x128xf32>
    %6 = vector.shape_cast %5 : vector<1x1x128xf32> to vector<1x128xf32>
    %7 = arith.mulf %4, %4 : vector<16x128xf32>
    %cst = arith.constant 0.000000e+00 : f32
    %8 = vector.broadcast %cst : f32 to vector<16x128xf32>
    %9 = arith.subf %8, %7 : vector<16x128xf32>
    %10 = vector.broadcast %6 : vector<1x128xf32> to vector<16x128xf32>
    %11 = arith.mulf %9, %10 : vector<16x128xf32>
    %cst_6 = arith.constant 2.000000e+00 : f32
    %12 = vector.broadcast %cst_6 : f32 to vector<16x128xf32>
    %13 = arith.mulf %12, %4 : vector<16x128xf32>
    %14 = vector.broadcast %6 : vector<1x128xf32> to vector<16x128xf32>
    %15 = arith.mulf %13, %14 : vector<16x128xf32>
    %16 = tpu.concatenate %11, %15 in 0 : vector<16x128xf32>, vector<16x128xf32> -> vector<32x128xf32>
    %c0_7 = arith.constant 0 : index
    %c0_8 = arith.constant 0 : index
    %c0_9 = arith.constant 0 : index
    %17 = vector.load %arg6[%c0_7, %c0_8, %c0_9] : memref<1x128x32xf32, #tpu.memory_space<vmem>>, vector<1x128x32xf32>
    %18 = vector.shape_cast %17 : vector<1x128x32xf32> to vector<128x32xf32>
    %cst_10 = arith.constant dense<0.000000e+00> : vector<128x128xf32>
    %19 = tpu.matmul %18, %16, %cst_10 {dimension_numbers = #tpu.dot_dimension_numbers<[1], [0], [0], [1], [0, 0, 1, 1], [], []>} : vector<128x32xf32>, vector<32x128xf32>, vector<128x128xf32> -> vector<128x128xf32>
    %c0_11 = arith.constant 0 : index
    %c0_12 = arith.constant 0 : index
    %c0_13 = arith.constant 0 : index
    %20 = vector.load %arg7[%c0_11, %c0_12, %c0_13] : memref<1x128x1xf32, #tpu.memory_space<vmem>>, vector<1x128x1xf32>
    %21 = vector.shape_cast %20 : vector<1x128x1xf32> to vector<128x1xf32>
    %22 = vector.broadcast %21 : vector<128x1xf32> to vector<128x128xf32>
    %23 = vector.broadcast %6 : vector<1x128xf32> to vector<128x128xf32>
    %24 = arith.mulf %22, %23 : vector<128x128xf32>
    %25 = arith.subf %19, %24 : vector<128x128xf32>
    %c128_i32 = arith.constant 128 : i32
    %26 = arith.muli %arg2, %c128_i32 : i32
    %27 = tpu.iota {dimensions = array<i32: 1>} : vector<1x128xi32>
    %28 = vector.broadcast %26 : i32 to vector<1x128xi32>
    %29 = arith.addi %28, %27 : vector<1x128xi32>
    %c0_14 = arith.constant 0 : index
    %30 = memref.load %arg3[%c0_14] : memref<1xi32, #tpu.memory_space<smem>>
    %31 = vector.broadcast %30 : i32 to vector<1x128xi32>
    %32 = arith.cmpi slt, %29, %31 : vector<1x128xi32>
    %cst_15 = arith.constant -1.000000e+30 : f32
    %33 = vector.shape_cast %32 : vector<1x128xi1> to vector<1x128xi1>
    %34 = vector.broadcast %33 : vector<1x128xi1> to vector<128x128xi1>
    %35 = vector.broadcast %cst_15 : f32 to vector<128x128xf32>
    %36 = arith.select %34, %25, %35 : vector<128x128xi1>, vector<128x128xf32>
    %c0_16 = arith.constant 0 : index
    %c0_17 = arith.constant 0 : index
    %37 = vector.load %arg10[%c0_16, %c0_17] : memref<128x1xf32, #tpu.memory_space<vmem>>, vector<128x1xf32>
    %cst_18 = arith.constant dense<0xFF800000> : vector<128xf32>
    %38 = vector.multi_reduction <maximumf>, %36, %cst_18 [1] : vector<128x128xf32> to vector<128xf32>
    %39 = vector.shape_cast %38 : vector<128xf32> to vector<128x1xf32>
    %40 = arith.maximumf %37, %39 : vector<128x1xf32>
    %41 = arith.subf %37, %40 : vector<128x1xf32>
    %42 = math.exp %41 : vector<128x1xf32>
    %43 = vector.broadcast %40 : vector<128x1xf32> to vector<128x128xf32>
    %44 = arith.subf %36, %43 : vector<128x128xf32>
    %45 = math.exp %44 : vector<128x128xf32>
    %c0_19 = arith.constant 0 : index
    %c0_20 = arith.constant 0 : index
    %46 = vector.load %arg11[%c0_19, %c0_20] : memref<128x1xf32, #tpu.memory_space<vmem>>, vector<128x1xf32>
    %47 = arith.mulf %42, %46 : vector<128x1xf32>
    %cst_21 = arith.constant dense<0.000000e+00> : vector<128xf32>
    %48 = vector.multi_reduction <add>, %45, %cst_21 [1] : vector<128x128xf32> to vector<128xf32>
    %49 = vector.shape_cast %48 : vector<128xf32> to vector<128x1xf32>
    %50 = arith.addf %47, %49 : vector<128x1xf32>
    %c0_22 = arith.constant 0 : index
    %c0_23 = arith.constant 0 : index
    %51 = vector.load %arg11[%c0_22, %c0_23] : memref<128x1xf32, #tpu.memory_space<vmem>>, vector<128x1xf32>
    tpu.vector_store %arg11[%c0_22, %c0_23], %50 {strides = array<i32>} : memref<128x1xf32, #tpu.memory_space<vmem>>, vector<128x1xf32>,
    %c0_24 = arith.constant 0 : index
    %c0_25 = arith.constant 0 : index
    %52 = vector.load %arg10[%c0_24, %c0_25] : memref<128x1xf32, #tpu.memory_space<vmem>>, vector<128x1xf32>
    tpu.vector_store %arg10[%c0_24, %c0_25], %40 {strides = array<i32>} : memref<128x1xf32, #tpu.memory_space<vmem>>, vector<128x1xf32>,
    %c0_26 = arith.constant 0 : index
    %c0_27 = arith.constant 0 : index
    %c0_28 = arith.constant 0 : index
    %53 = vector.load %arg8[%c0_26, %c0_27, %c0_28] : memref<1x128x32xbf16, #tpu.memory_space<vmem>>, vector<1x128x32xbf16>
    %54 = vector.shape_cast %53 : vector<1x128x32xbf16> to vector<128x32xbf16>
    %55 = arith.truncf %45 : vector<128x128xf32> to vector<128x128xbf16>
    %cst_29 = arith.constant dense<0.000000e+00> : vector<128x32xf32>
    %56 = tpu.matmul %55, %54, %cst_29 {dimension_numbers = #tpu.dot_dimension_numbers<[1], [0], [0], [1], [0, 0, 1, 1], [], []>} : vector<128x128xbf16>, vector<128x32xbf16>, vector<128x32xf32> -> vector<128x32xf32>
    %c0_30 = arith.constant 0 : index
    %c0_31 = arith.constant 0 : index
    %c0_32 = arith.constant 0 : index
    %57 = vector.load %arg9[%c0_30, %c0_31, %c0_32] : memref<1x128x32xf32, #tpu.memory_space<vmem>>, vector<1x128x32xf32>
    %58 = vector.shape_cast %57 : vector<1x128x32xf32> to vector<128x32xf32>
    %59 = vector.broadcast %42 : vector<128x1xf32> to vector<128x32xf32>
    %60 = arith.mulf %59, %58 : vector<128x32xf32>
    %61 = arith.addf %60, %56 : vector<128x32xf32>
    %c0_33 = arith.constant 0 : index
    %c0_34 = arith.constant 0 : index
    %c0_35 = arith.constant 0 : index
    %62 = vector.load %arg9[%c0_33, %c0_34, %c0_35] : memref<1x128x32xf32, #tpu.memory_space<vmem>>, vector<1x128x32xf32>
    %63 = vector.shape_cast %62 : vector<1x128x32xf32> to vector<128x32xf32>
    %64 = vector.shape_cast %61 : vector<128x32xf32> to vector<1x128x32xf32>
    tpu.vector_store %arg9[%c0_33, %c0_34, %c0_35], %64 {strides = array<i32>} : memref<1x128x32xf32, #tpu.memory_space<vmem>>, vector<1x128x32xf32>,
    %c3_i32 = arith.constant 3 : i32
    %65 = arith.cmpi eq, %arg2, %c3_i32 : i32
    %66 = arith.extui %65 : i1 to i32
    %c0_i32_36 = arith.constant 0 : i32
    %67 = arith.cmpi ne, %66, %c0_i32_36 : i32
    scf.if %67 {
      %c0_37 = arith.constant 0 : index
      %c0_38 = arith.constant 0 : index
      %c0_39 = arith.constant 0 : index
      %68 = vector.load %arg9[%c0_37, %c0_38, %c0_39] : memref<1x128x32xf32, #tpu.memory_space<vmem>>, vector<1x128x32xf32>
      %69 = vector.shape_cast %68 : vector<1x128x32xf32> to vector<128x32xf32>
      %c0_40 = arith.constant 0 : index
      %c0_41 = arith.constant 0 : index
      %70 = vector.load %arg11[%c0_40, %c0_41] : memref<128x1xf32, #tpu.memory_space<vmem>>, vector<128x1xf32>
      %71 = tpu.reciprocal %70 {approx = true} : vector<128x1xf32> -> vector<128x1xf32>
      %72 = vector.broadcast %71 : vector<128x1xf32> to vector<128x32xf32>
      %73 = arith.mulf %69, %72 : vector<128x32xf32>
      %c0_42 = arith.constant 0 : index
      %c0_43 = arith.constant 0 : index
      %c0_44 = arith.constant 0 : index
      %74 = vector.load %arg9[%c0_42, %c0_43, %c0_44] : memref<1x128x32xf32, #tpu.memory_space<vmem>>, vector<1x128x32xf32>
      %75 = vector.shape_cast %74 : vector<1x128x32xf32> to vector<128x32xf32>
      %76 = vector.shape_cast %73 : vector<128x32xf32> to vector<1x128x32xf32>
      tpu.vector_store %arg9[%c0_42, %c0_43, %c0_44], %76 {strides = array<i32>} : memref<1x128x32xf32, #tpu.memory_space<vmem>>, vector<1x128x32xf32>,
    } else {
    }
    return
  }
  func.func @transform_0(%arg0: i32, %arg1: i32, %arg2: i32, %arg3: memref<1xi32, #tpu.memory_space<smem>>) -> (i32, i32, i32) {
    %c0_i32 = arith.constant 0 : i32
    %c0_i32_0 = arith.constant 0 : i32
    return %arg0, %c0_i32, %arg2 : i32, i32, i32
  }
  func.func @transform_1(%arg0: i32, %arg1: i32, %arg2: i32, %arg3: memref<1xi32, #tpu.memory_space<smem>>) -> (i32, i32, i32) {
    %c0_i32 = arith.constant 0 : i32
    %c0_i32_0 = arith.constant 0 : i32
    return %arg0, %c0_i32, %arg2 : i32, i32, i32
  }
  func.func @transform_2(%arg0: i32, %arg1: i32, %arg2: i32, %arg3: memref<1xi32, #tpu.memory_space<smem>>) -> (i32, i32, i32) {
    %c0_i32 = arith.constant 0 : i32
    %c0_i32_0 = arith.constant 0 : i32
    return %arg0, %arg1, %c0_i32 : i32, i32, i32
  }
  func.func @transform_3(%arg0: i32, %arg1: i32, %arg2: i32, %arg3: memref<1xi32, #tpu.memory_space<smem>>) -> (i32, i32, i32) {
    %c0_i32 = arith.constant 0 : i32
    %c0_i32_0 = arith.constant 0 : i32
    return %arg0, %arg1, %c0_i32 : i32, i32, i32
  }
  func.func @transform_4(%arg0: i32, %arg1: i32, %arg2: i32, %arg3: memref<1xi32, #tpu.memory_space<smem>>) -> (i32, i32, i32) {
    %c0_i32 = arith.constant 0 : i32
    %c0_i32_0 = arith.constant 0 : i32
    return %arg0, %arg2, %c0_i32 : i32, i32, i32
  }
  func.func @transform_5(%arg0: i32, %arg1: i32, %arg2: i32, %arg3: memref<1xi32, #tpu.memory_space<smem>>) -> (i32, i32, i32) {
    %c0_i32 = arith.constant 0 : i32
    %c0_i32_0 = arith.constant 0 : i32
    return %arg0, %arg1, %c0_i32 : i32, i32, i32
  }
}

</mosaic_0001>

<llo_original>
// kernel: tpu_custom_call.1
$region0: #{tpu_custom_call.1}
  #allocation0 [shape = 'u32[]', space=smem, size = 0x4, offset = 0x4, fixed_abs, tag = 'smem constant byte address 0x4 - core index']
  #allocation1 [shape = 'u32[72,128]{1,0:T(1,128)}', space=vmem, size = 0x9000, scoped, tag = 'internal scratch']
  #allocation2 [shape = 'f32[128,1]{1,0:T(8,128)}', space=vmem, size = 0x10000, scoped, tag = 'scratch operand']
  #allocation3 [shape = 'f32[128,1]{1,0:T(8,128)}', space=vmem, size = 0x10000, scoped, tag = 'scratch operand']
  #allocation4 [shape = 's32[1]{0}', space=sflag, size = 0x4, scoped, tag = 'scoped memory for tpu_custom_call.1']
  #allocation5 [shape = 's32[1]{0:T(128)S(6)}', space=smem, size = 0x200, scoped, tag = 'prefetched SMEM operand 0']
  %s0 = inlined_call_operand.<no memory space> [shape: s32[1], index: 0, kind: input, shape index: {}]
  %s1 = inlined_call_operand.vmem [shape: f32[2,16,512], index: 1, kind: input, shape index: {}]
  %s2 = inlined_call_operand.vmem [shape: f32[2,1,512], index: 2, kind: input, shape index: {}]
  %s3 = inlined_call_operand.vmem [shape: f32[2,256,32], index: 3, kind: input, shape index: {}]
  %s4 = inlined_call_operand.vmem [shape: f32[2,256,1], index: 4, kind: input, shape index: {}]
  %s5 = inlined_call_operand.vmem [shape: bf16[2,512,32], index: 5, kind: input, shape index: {}]
  %s6 = inlined_call_operand.vmem [shape: f32[2,256,32], index: 6, kind: output, shape index: {}]
  %s7 = sld [smem:[#allocation0]]
  $region99: #{tpu_custom_call.1} parent=0
    _
  %s9 = ssub.s32 1, %s7
  %s10 = scalar_select 0, %s9, %s7
  %11 = sst [smem:[#allocation5]] %s0
  $region1: #{tpu_custom_call.1} parent=0
    #allocation6 [shape = 'u8[16384]{0}', space=vmem, size = 0x4000, scoped, tag = 'input window, operand 1']
    loop: start=0, step=1, limit=18
    $region2: #{tpu_custom_call.1} parent=1 // loop_pre_header
      _
    $region3: #{tpu_custom_call.1} parent=1 // loop_header
      %s13 = sphi 0, %s17
      %p14 = scmp.ge.s32.totalorder %s13, 18
      %s20 = sphi 0, %s39
      %s21 = sphi 0, %s35
      %s22 = sphi 0, %s31
      %s23 = sphi 0, %s20
      %s24 = sphi 0, %s21
      %s25 = sphi 0, %s22
      %s26 = sphi 0, %s23
      %s27 = sphi 0, %s24
      %s28 = sphi 0, %s25
      %s44 = sphi 0, %s46
      %s47 = sphi 0, %s44
      %s48 = sphi 0, %s47
      %s64 = sphi 0, %s48
      %s72 = sphi 0, %s74
      %s75 = sphi 0, %s72
      %s76 = sphi 0, %s75
      %s92 = sphi 0, %s76
      %s100 = sphi 0, %s102
      %s103 = sphi 0, %s100
      %s104 = sphi 0, %s103
      %s120 = sphi 0, %s104
      %s128 = sphi 0, %s130
      %s131 = sphi 0, %s128
      %s132 = sphi 0, %s131
      %s148 = sphi 0, %s132
      %s156 = sphi 0, %s158
      %s159 = sphi 0, %s156
      %s160 = sphi 0, %s159
      %s176 = sphi 0, %s160
      %s184 = sphi 0, %s186
      %s187 = sphi 0, %s184
      %s188 = sphi 0, %s187
      %s204 = sphi 0, %s188
    $region4: #{tpu_custom_call.1} parent=1 // loop_header_branch
      %16 = sbr.rel (%p14) target = $region8
    $region5: #{tpu_custom_call.1} parent=1 // loop_body
      %s18 = ssub.s32 %s13, 1
      %s19 = ssub.s32 %s13, 2
      %s29 = sadd.s32 1, %s22
      %p30 = scmp.ge.s32.totalorder %s29, 4
      %s31 = scalar_select %p30, 0, %s29
      %s32 = sadd.s32 1, %s21
      %s33 = scalar_select %p30, %s32, %s21
      %p34 = scmp.ge.s32.totalorder %s33, 2
      %s35 = scalar_select %p34, 0, %s33
      %s36 = sadd.s32 1, %s20
      %s37 = scalar_select %p34, %s36, %s20
      %p38 = scmp.ge.s32.totalorder %s37, 2
      %s39 = scalar_select %p38, 0, %s37
      %s40 = ssub.s32 %s20, %s39
      %s41 = ssub.s32 %s22, %s31
      %s42 = sor.u32 %s40, %s41
      %p43 = scmp.eq.s32.totalorder %s42, 0
      %s45 = sadd.s32 %s44, 1
      %s46 = scalar_select %p43, %s44, %s45
      %p49 = pneg %p43
      %p50 = scmp.eq.s32.totalorder %s13, 15
      %p51 = por %p49, %p50
      %p52 = scmp.ne.s32.totalorder %s44, %s47
      %p53 = scmp.eq.s32.totalorder %s13, 0
      %p54 = por %p52, %p53
      %p55 = scmp.ne.s32.totalorder %s44, %s47
      %p56 = scmp.eq.s32.totalorder %s18, 15
      %p57 = por %p55, %p56
      %p58 = scmp.ne.s32.totalorder %s47, %s48
      %p59 = scmp.eq.s32.totalorder %s18, 0
      %p60 = por %p58, %p59
      %p61 = scmp.ne.s32.totalorder %s47, %s48
      %p62 = scmp.eq.s32.totalorder %s19, 15
      %p63 = por %p61, %p62
      %p65 = scmp.ne.s32.totalorder %s48, %s64
      %p66 = scmp.eq.s32.totalorder %s19, 0
      %p67 = por %p65, %p66
      %s68 = ssub.s32 %s20, %s39
      %s69 = ssub.s32 %s22, %s31
      %s70 = sor.u32 %s68, %s69
      %p71 = scmp.eq.s32.totalorder %s70, 0
      %s73 = sadd.s32 %s72, 1
      %s74 = scalar_select %p71, %s72, %s73
      %p77 = pneg %p71
      %p78 = scmp.eq.s32.totalorder %s13, 15
      %p79 = por %p77, %p78
      %p80 = scmp.ne.s32.totalorder %s72, %s75
      %p81 = scmp.eq.s32.totalorder %s13, 0
      %p82 = por %p80, %p81
      %p83 = scmp.ne.s32.totalorder %s72, %s75
      %p84 = scmp.eq.s32.totalorder %s18, 15
      %p85 = por %p83, %p84
      %p86 = scmp.ne.s32.totalorder %s75, %s76
      %p87 = scmp.eq.s32.totalorder %s18, 0
      %p88 = por %p86, %p87
      %p89 = scmp.ne.s32.totalorder %s75, %s76
      %p90 = scmp.eq.s32.totalorder %s19, 15
      %p91 = por %p89, %p90
      %p93 = scmp.ne.s32.totalorder %s76, %s92
      %p94 = scmp.eq.s32.totalorder %s19, 0
      %p95 = por %p93, %p94
      %s96 = ssub.s32 %s20, %s39
      %s97 = ssub.s32 %s21, %s35
      %s98 = sor.u32 %s96, %s97
      %p99 = scmp.eq.s32.totalorder %s98, 0
      %s101 = sadd.s32 %s100, 1
      %s102 = scalar_select %p99, %s100, %s101
      %p105 = pneg %p99
      %p106 = scmp.eq.s32.totalorder %s13, 15
      %p107 = por %p105, %p106
      %p108 = scmp.ne.s32.totalorder %s100, %s103
      %p109 = scmp.eq.s32.totalorder %s13, 0
      %p110 = por %p108, %p109
      %p111 = scmp.ne.s32.totalorder %s100, %s103
      %p112 = scmp.eq.s32.totalorder %s18, 15
      %p113 = por %p111, %p112
      %p114 = scmp.ne.s32.totalorder %s103, %s104
      %p115 = scmp.eq.s32.totalorder %s18, 0
      %p116 = por %p114, %p115
      %p117 = scmp.ne.s32.totalorder %s103, %s104
      %p118 = scmp.eq.s32.totalorder %s19, 15
      %p119 = por %p117, %p118
      %p121 = scmp.ne.s32.totalorder %s104, %s120
      %p122 = scmp.eq.s32.totalorder %s19, 0
      %p123 = por %p121, %p122
      %s124 = ssub.s32 %s20, %s39
      %s125 = ssub.s32 %s21, %s35
      %s126 = sor.u32 %s124, %s125
      %p127 = scmp.eq.s32.totalorder %s126, 0
      %s129 = sadd.s32 %s128, 1
      %s130 = scalar_select %p127, %s128, %s129
      %p133 = pneg %p127
      %p134 = scmp.eq.s32.totalorder %s13, 15
      %p135 = por %p133, %p134
      %p136 = scmp.ne.s32.totalorder %s128, %s131
      %p137 = scmp.eq.s32.totalorder %s13, 0
      %p138 = por %p136, %p137
      %p139 = scmp.ne.s32.totalorder %s128, %s131
      %p140 = scmp.eq.s32.totalorder %s18, 15
      %p141 = por %p139, %p140
      %p142 = scmp.ne.s32.totalorder %s131, %s132
      %p143 = scmp.eq.s32.totalorder %s18, 0
      %p144 = por %p142, %p143
      %p145 = scmp.ne.s32.totalorder %s131, %s132
      %p146 = scmp.eq.s32.totalorder %s19, 15
      %p147 = por %p145, %p146
      %p149 = scmp.ne.s32.totalorder %s132, %s148
      %p150 = scmp.eq.s32.totalorder %s19, 0
      %p151 = por %p149, %p150
      %s152 = ssub.s32 %s20, %s39
      %s153 = ssub.s32 %s22, %s31
      %s154 = sor.u32 %s152, %s153
      %p155 = scmp.eq.s32.totalorder %s154, 0
      %s157 = sadd.s32 %s156, 1
      %s158 = scalar_select %p155, %s156, %s157
      %p161 = pneg %p155
      %p162 = scmp.eq.s32.totalorder %s13, 15
      %p163 = por %p161, %p162
      %p164 = scmp.ne.s32.totalorder %s156, %s159
      %p165 = scmp.eq.s32.totalorder %s13, 0
      %p166 = por %p164, %p165
      %p167 = scmp.ne.s32.totalorder %s156, %s159
      %p168 = scmp.eq.s32.totalorder %s18, 15
      %p169 = por %p167, %p168
      %p170 = scmp.ne.s32.totalorder %s159, %s160
      %p171 = scmp.eq.s32.totalorder %s18, 0
      %p172 = por %p170, %p171
      %p173 = scmp.ne.s32.totalorder %s159, %s160
      %p174 = scmp.eq.s32.totalorder %s19, 15
      %p175 = por %p173, %p174
      %p177 = scmp.ne.s32.totalorder %s160, %s176
      %p178 = scmp.eq.s32.totalorder %s19, 0
      %p179 = por %p177, %p178
      %s180 = ssub.s32 %s20, %s39
      %s181 = ssub.s32 %s21, %s35
      %s182 = sor.u32 %s180, %s181
      %p183 = scmp.eq.s32.totalorder %s182, 0
      %s185 = sadd.s32 %s184, 1
      %s186 = scalar_select %p183, %s184, %s185
      %p189 = pneg %p183
      %p190 = scmp.eq.s32.totalorder %s13, 15
      %p191 = por %p189, %p190
      %p192 = scmp.ne.s32.totalorder %s184, %s187
      %p193 = scmp.eq.s32.totalorder %s13, 0
      %p194 = por %p192, %p193
      %p195 = scmp.ne.s32.totalorder %s184, %s187
      %p196 = scmp.eq.s32.totalorder %s18, 15
      %p197 = por %p195, %p196
      %p198 = scmp.ne.s32.totalorder %s187, %s188
      %p199 = scmp.eq.s32.totalorder %s18, 0
      %p200 = por %p198, %p199
      %p201 = scmp.ne.s32.totalorder %s187, %s188
      %p202 = scmp.eq.s32.totalorder %s19, 15
      %p203 = por %p201, %p202
      %p205 = scmp.ne.s32.totalorder %s188, %s204
      %p206 = scmp.eq.s32.totalorder %s19, 0
      %p207 = por %p205, %p206
      %p208 = scmp.le.s32.totalorder 1, %s13
      %p209 = scmp.lt.s32.totalorder %s13, 17
      %p210 = pnand %p208, %p209
      %p211 = pneg %p210
      // Predicated region
      $region9: #{tpu_custom_call.1} parent=5 // pred_check
        _
      $region10: #{tpu_custom_call.1} parent=5 // pred_check_branch
        %213 = sbr.rel (%p210) target = $region12
      $region11: #{tpu_custom_call.1} parent=5 // pred_region
        %s214 = ssub.s32 %s13, 1
      $region12: #{tpu_custom_call.1} parent=5 // pred_fallthru
        _
      %p215 = scmp.lt.s32.totalorder %s13, 16
      // Predicated region
      $region13: #{tpu_custom_call.1} parent=5 // pred_check
        %p216 = pneg %p215
      $region14: #{tpu_custom_call.1} parent=5 // pred_check_branch
        %218 = sbr.rel (%p216) target = $region16
      $region15: #{tpu_custom_call.1} parent=5 // pred_region
        // Predicated region
        $region17: #{tpu_custom_call.1} parent=15 // pred_check
          %p219 = pneg %p54
        $region18: #{tpu_custom_call.1} parent=15 // pred_check_branch
          %221 = sbr.rel (%p219) target = $region20
        $region19: #{tpu_custom_call.1} parent=15 // pred_region
          %s222 = sand.u32 %s44, 1
          %s223 = sand.u32 %s44, 1
          %s224 = smul.addr %s223, 16
          %s225 = scalar_lea.vmem [#allocation6], %s224
          %s226 = smul.addr %s20, 8
          %s227 = sadd.s32 %s22, %s226
          %s228 = smul.addr %s227, 8
          %s229 = scalar_lea.vmem %s1, %s228
          // Predicated region
          $region21: #{tpu_custom_call.1} parent=19 // pred_check
            _
          $region22: #{tpu_custom_call.1} parent=19 // pred_check_branch
            %231 = sbr.rel (0) target = $region24
          $region23: #{tpu_custom_call.1} parent=19 // pred_region
            // Predicated region
            $region25: #{tpu_custom_call.1} parent=23 // pred_check
              _
            $region26: #{tpu_custom_call.1} parent=23 // pred_check_branch
              %233 = sbr.rel (0) target = $region28
            $region27: #{tpu_custom_call.1} parent=23 // pred_region
              // Predicated region
              $region40: #{tpu_custom_call.1} parent=27 // pred_check
                _
              $region41: #{tpu_custom_call.1} parent=27 // pred_check_branch
                %251 = sbr.rel (0) target = $region43
              $region42: #{tpu_custom_call.1} parent=27 // pred_region
                loop: start=0, step=1, limit=1
                $region44: #{tpu_custom_call.1} parent=42 // loop_pre_header
                  _
                $region45: #{tpu_custom_call.1} parent=42 // loop_header
                  %s253 = sphi 0, %s257
                  %p254 = scmp.ge.s32.totalorder %s253, 1
                  %s258 = sphi %s229, %s229
                  %s259 = sphi %s225, %s225
                $region46: #{tpu_custom_call.1} parent=42 // loop_header_branch
                  %256 = sbr.rel (%p254) target = $region50
                $region47: #{tpu_custom_call.1} parent=42 // loop_body
                  %v260 = vld [vmem:[%s258] sm:$0xff]
                  %261 = vst [vmem:[%s259] sm:$0xff] %v260
                  %v262 = vld [vmem:[%s258 + $0x20] sm:$0xff]
                  %263 = vst [vmem:[%s259 + $0x8] sm:$0xff] %v262
                $region48: #{tpu_custom_call.1} parent=42 // loop_footer
                  %s257 = sadd.s32 1, %s253
                $region49: #{tpu_custom_call.1} parent=42 // loop_footer_branch
                  %252 = sbr.rel target = $region45
                $region50: #{tpu_custom_call.1} parent=42 // loop_exit
                  _
              $region43: #{tpu_custom_call.1} parent=27 // pred_fallthru
                _
              // Predicated region
              $region51: #{tpu_custom_call.1} parent=27 // pred_check
                _
              $region52: #{tpu_custom_call.1} parent=27 // pred_check_branch
                %265 = sbr.rel target = $region54
              $region53: #{tpu_custom_call.1} parent=27 // pred_region
                _
              $region54: #{tpu_custom_call.1} parent=27 // pred_fallthru
                _
            $region28: #{tpu_custom_call.1} parent=23 // pred_fallthru
              _
            // Predicated region
            $region29: #{tpu_custom_call.1} parent=23 // pred_check
              _
            $region30: #{tpu_custom_call.1} parent=23 // pred_check_branch
              %235 = sbr.rel target = $region32
            $region31: #{tpu_custom_call.1} parent=23 // pred_region
              %s237 = ssub.s32 256, 1
              loop: start=0, step=1, limit=1
              $region33: #{tpu_custom_call.1} parent=31 // loop_pre_header
                _
              $region34: #{tpu_custom_call.1} parent=31 // loop_header
                %s239 = sphi 0, %s243
                %p240 = scmp.ge.s32.totalorder %s239, 1
                %s244 = sphi %s229, %s229
                %s245 = sphi %s225, %s225
              $region35: #{tpu_custom_call.1} parent=31 // loop_header_branch
                %242 = sbr.rel (%p240) target = $region39
              $region36: #{tpu_custom_call.1} parent=31 // loop_body
                %v246 = vld [vmem:[%s244] sm:%s237]
                %247 = vst [vmem:[%s245] sm:%s237] %v246
                %v248 = vld [vmem:[%s244 + $0x20] sm:%s237]
                %249 = vst [vmem:[%s245 + $0x8] sm:%s237] %v248
              $region37: #{tpu_custom_call.1} parent=31 // loop_footer
                %s243 = sadd.s32 1, %s239
              $region38: #{tpu_custom_call.1} parent=31 // loop_footer_branch
                %238 = sbr.rel target = $region34
              $region39: #{tpu_custom_call.1} parent=31 // loop_exit
                _
            $region32: #{tpu_custom_call.1} parent=23 // pred_fallthru
              _
          $region24: #{tpu_custom_call.1} parent=19 // pred_fallthru
            _
          %266 = vnop
        $region20: #{tpu_custom_call.1} parent=15 // pred_fallthru
          _
        // Predicated region
        $region55: #{tpu_custom_call.1} parent=15 // pred_check
          %p267 = pneg %p82
        $region56: #{tpu_custom_call.1} parent=15 // pred_check_branch
          %269 = sbr.rel (%p267) target = $region58
        $region57: #{tpu_custom_call.1} parent=15 // pred_region
          %p270 = scmp.lt.s32.totalorder %s20, 1
          %s271 = scalar_select %p270, %s20, 1
          %p272 = scmp.lt.s32.totalorder %s22, 3
          %s273 = scalar_select %p272, %s22, 3
          %s274 = smul.addr %s271, 4
          %s275 = sadd.s32 %s273, %s274
          %s276 = scalar_lea.vmem %s2, %s275
        $region58: #{tpu_custom_call.1} parent=15 // pred_fallthru
          _
        // Predicated region
        $region59: #{tpu_custom_call.1} parent=15 // pred_check
          %p277 = pneg %p110
        $region60: #{tpu_custom_call.1} parent=15 // pred_check_branch
          %279 = sbr.rel (%p277) target = $region62
        $region61: #{tpu_custom_call.1} parent=15 // pred_region
          %s280 = smul.u32 16, %s21
          %p281 = scmp.lt.s32.totalorder %s20, 1
          %s282 = scalar_select %p281, %s20, 1
          %p283 = scmp.lt.s32.totalorder %s280, 31
          %s284 = scalar_select %p283, %s280, 31
          %s285 = smul.addr %s282, 32
          %s286 = sadd.s32 %s284, %s285
          %s287 = smul.addr %s286, 8
          %s288 = scalar_lea.vmem %s3, %s287
          %s289 = smul.u32 16, %s21
        $region62: #{tpu_custom_call.1} parent=15 // pred_fallthru
          _
        // Predicated region
        $region63: #{tpu_custom_call.1} parent=15 // pred_check
          %p290 = pneg %p138
        $region64: #{tpu_custom_call.1} parent=15 // pred_check_branch
          %292 = sbr.rel (%p290) target = $region66
        $region65: #{tpu_custom_call.1} parent=15 // pred_region
          %s293 = smul.u32 16, %s21
          %p294 = scmp.lt.s32.totalorder %s20, 1
          %s295 = scalar_select %p294, %s20, 1
          %p296 = scmp.lt.s32.totalorder %s293, 31
          %s297 = scalar_select %p296, %s293, 31
          %s298 = smul.addr %s295, 32
          %s299 = sadd.s32 %s297, %s298
          %s300 = smul.addr %s299, 8
          %s301 = scalar_lea.vmem %s4, %s300
          %s302 = smul.u32 16, %s21
        $region66: #{tpu_custom_call.1} parent=15 // pred_fallthru
          _
        // Predicated region
        $region67: #{tpu_custom_call.1} parent=15 // pred_check
          %p303 = pneg %p166
        $region68: #{tpu_custom_call.1} parent=15 // pred_check_branch
          %305 = sbr.rel (%p303) target = $region70
        $region69: #{tpu_custom_call.1} parent=15 // pred_region
          %s306 = smul.u32 16, %s22
          %p307 = scmp.lt.s32.totalorder %s20, 1
          %s308 = scalar_select %p307, %s20, 1
          %p309 = scmp.lt.s32.totalorder %s306, 63
          %s310 = scalar_select %p309, %s306, 63
          %s311 = smul.addr %s308, 64
          %s312 = sadd.s32 %s310, %s311
          %s313 = smul.addr %s312, 4
          %s314 = scalar_lea.vmem %s5, %s313
          %s315 = smul.u32 16, %s22
        $region70: #{tpu_custom_call.1} parent=15 // pred_fallthru
          _
      $region16: #{tpu_custom_call.1} parent=5 // pred_fallthru
        _
      %p316 = scmp.le.s32.totalorder 1, %s13
      %p317 = scmp.lt.s32.totalorder %s13, 17
      %p318 = pnand %p316, %p317
      %p319 = pneg %p318
      // Predicated region
      $region71: #{tpu_custom_call.1} parent=5 // pred_check
        _
      $region72: #{tpu_custom_call.1} parent=5 // pred_check_branch
        %321 = sbr.rel (%p318) target = $region74
      $region73: #{tpu_custom_call.1} parent=5 // pred_region
        %s322 = ssub.s32 %s13, 1
        %s323 = sand.u32 %s47, 1
        %s324 = sand.u32 %s47, 1
        %s325 = smul.addr %s324, 16
        %s326 = scalar_lea.vmem [#allocation6], %s325
        // Predicated region
        $region75: #{tpu_custom_call.1} parent=73 // pred_check
          %p327 = pneg %p60
        $region76: #{tpu_custom_call.1} parent=73 // pred_check_branch
          %329 = sbr.rel (%p327) target = $region78
        $region77: #{tpu_custom_call.1} parent=73 // pred_region
          _
        $region78: #{tpu_custom_call.1} parent=73 // pred_fallthru
          _
        %s330 = sand.u32 %s47, 1
        %s331 = sand.u32 %s47, 1
        %s332 = smul.addr %s331, 16
        %s333 = scalar_lea.vmem [#allocation6], %s332
        %p334 = pneg %p60
        %p335 = pneg %p57
        %p336 = scmp.lt.s32.totalorder %s23, 1
        %s337 = scalar_select %p336, %s23, 1
        %p338 = scmp.lt.s32.totalorder %s25, 3
        %s339 = scalar_select %p338, %s25, 3
        %s340 = smul.addr %s337, 4
        %s341 = sadd.s32 %s339, %s340
        %s342 = scalar_lea.vmem %s2, %s341
        %p343 = pneg %p88
        %p344 = pneg %p85
        %s345 = smul.u32 16, %s24
        %p346 = scmp.lt.s32.totalorder %s23, 1
        %s347 = scalar_select %p346, %s23, 1
        %p348 = scmp.lt.s32.totalorder %s345, 31
        %s349 = scalar_select %p348, %s345, 31
        %s350 = smul.addr %s347, 32
        %s351 = sadd.s32 %s349, %s350
        %s352 = smul.addr %s351, 8
        %s353 = scalar_lea.vmem %s3, %s352
        %p354 = pneg %p116
        %p355 = pneg %p113
        %s356 = smul.u32 16, %s24
        %p357 = scmp.lt.s32.totalorder %s23, 1
        %s358 = scalar_select %p357, %s23, 1
        %p359 = scmp.lt.s32.totalorder %s356, 31
        %s360 = scalar_select %p359, %s356, 31
        %s361 = smul.addr %s358, 32
        %s362 = sadd.s32 %s360, %s361
        %s363 = smul.addr %s362, 8
        %s364 = scalar_lea.vmem %s4, %s363
        %p365 = pneg %p144
        %p366 = pneg %p141
        %s367 = smul.u32 16, %s25
        %p368 = scmp.lt.s32.totalorder %s23, 1
        %s369 = scalar_select %p368, %s23, 1
        %p370 = scmp.lt.s32.totalorder %s367, 63
        %s371 = scalar_select %p370, %s367, 63
        %s372 = smul.addr %s369, 64
        %s373 = sadd.s32 %s371, %s372
        %s374 = smul.addr %s373, 4
        %s375 = scalar_lea.vmem %s5, %s374
        %p376 = pneg %p172
        %p377 = pneg %p169
        %p378 = pneg %p200
        %p379 = pneg %p197
        %s380 = smul.u32 16, %s24
        %p381 = scmp.lt.s32.totalorder %s23, 1
        %s382 = scalar_select %p381, %s23, 1
        %p383 = scmp.lt.s32.totalorder %s380, 31
        %s384 = scalar_select %p383, %s380, 31
        %s385 = smul.addr %s382, 32
        %s386 = sadd.s32 %s384, %s385
        %s387 = smul.addr %s386, 8
        %s388 = scalar_lea.vmem %s6, %s387
        %p389 = scmp.lt.s32.totalorder %s23, 1
        %s390 = scalar_select %p389, %s23, 1
        %p391 = scmp.lt.s32.totalorder %s25, 3
        %s392 = scalar_select %p391, %s25, 3
        %s393 = smul.addr %s390, 4
        %s394 = sadd.s32 %s392, %s393
        %s395 = scalar_lea.vmem %s2, %s394
        %s396 = smul.u32 16, %s24
        %p397 = scmp.lt.s32.totalorder %s23, 1
        %s398 = scalar_select %p397, %s23, 1
        %p399 = scmp.lt.s32.totalorder %s396, 31
        %s400 = scalar_select %p399, %s396, 31
        %s401 = smul.addr %s398, 32
        %s402 = sadd.s32 %s400, %s401
        %s403 = smul.addr %s402, 8
        %s404 = scalar_lea.vmem %s3, %s403
        %s405 = smul.u32 16, %s24
        %s406 = smul.u32 16, %s24
        %p407 = scmp.lt.s32.totalorder %s23, 1
        %s408 = scalar_select %p407, %s23, 1
        %p409 = scmp.lt.s32.totalorder %s406, 31
        %s410 = scalar_select %p409, %s406, 31
        %s411 = smul.addr %s408, 32
        %s412 = sadd.s32 %s410, %s411
        %s413 = smul.addr %s412, 8
        %s414 = scalar_lea.vmem %s4, %s413
        %s415 = smul.u32 16, %s24
        %s416 = smul.u32 16, %s25
        %p417 = scmp.lt.s32.totalorder %s23, 1
        %s418 = scalar_select %p417, %s23, 1
        %p419 = scmp.lt.s32.totalorder %s416, 63
        %s420 = scalar_select %p419, %s416, 63
        %s421 = smul.addr %s418, 64
        %s422 = sadd.s32 %s420, %s421
        %s423 = smul.addr %s422, 4
        %s424 = scalar_lea.vmem %s5, %s423
        %s425 = smul.u32 16, %s25
        %s426 = smul.u32 16, %s24
        %p427 = scmp.lt.s32.totalorder %s23, 1
        %s428 = scalar_select %p427, %s23, 1
        %p429 = scmp.lt.s32.totalorder %s426, 31
        %s430 = scalar_select %p429, %s426, 31
        %s431 = smul.addr %s428, 32
        %s432 = sadd.s32 %s430, %s431
        %s433 = smul.addr %s432, 8
        %s434 = scalar_lea.vmem %s6, %s433
        %s435 = smul.u32 16, %s24
        %p436 = scmp.eq.s32.totalorder %s25, 0
        // Predicated region
        $region79: #{tpu_custom_call.1} parent=73 // pred_check
          %p437 = pneg %p436
        $region80: #{tpu_custom_call.1} parent=73 // pred_check_branch
          %439 = sbr.rel (%p437) target = $region82
        $region81: #{tpu_custom_call.1} parent=73 // pred_region
          %vm440 = vcmask 7168
          %441 = vst.msk [vmem:[#allocation2] sm:$0xff] %vm440, -1e+30
          %442 = vst.msk [vmem:[#allocation2 + $0x8] sm:$0xff] %vm440, -1e+30
          %443 = vst.msk [vmem:[#allocation2 + $0x10] sm:$0xff] %vm440, -1e+30
          %444 = vst.msk [vmem:[#allocation2 + $0x18] sm:$0xff] %vm440, -1e+30
          %445 = vst.msk [vmem:[#allocation2 + $0x20] sm:$0xff] %vm440, -1e+30
          %446 = vst.msk [vmem:[#allocation2 + $0x28] sm:$0xff] %vm440, -1e+30
          %447 = vst.msk [vmem:[#allocation2 + $0x30] sm:$0xff] %vm440, -1e+30
          %448 = vst.msk [vmem:[#allocation2 + $0x38] sm:$0xff] %vm440, -1e+30
          %449 = vst.msk [vmem:[#allocation2 + $0x40] sm:$0xff] %vm440, -1e+30
          %450 = vst.msk [vmem:[#allocation2 + $0x48] sm:$0xff] %vm440, -1e+30
          %451 = vst.msk [vmem:[#allocation2 + $0x50] sm:$0xff] %vm440, -1e+30
          %452 = vst.msk [vmem:[#allocation2 + $0x58] sm:$0xff] %vm440, -1e+30
          %453 = vst.msk [vmem:[#allocation2 + $0x60] sm:$0xff] %vm440, -1e+30
          %454 = vst.msk [vmem:[#allocation2 + $0x68] sm:$0xff] %vm440, -1e+30
          %455 = vst.msk [vmem:[#allocation2 + $0x70] sm:$0xff] %vm440, -1e+30
          %456 = vst.msk [vmem:[#allocation2 + $0x78] sm:$0xff] %vm440, -1e+30
          %457 = vst.msk [vmem:[#allocation3] sm:$0xff] %vm440, 0.0
          %458 = vst.msk [vmem:[#allocation3 + $0x8] sm:$0xff] %vm440, 0.0
          %459 = vst.msk [vmem:[#allocation3 + $0x10] sm:$0xff] %vm440, 0.0
          %460 = vst.msk [vmem:[#allocation3 + $0x18] sm:$0xff] %vm440, 0.0
          %461 = vst.msk [vmem:[#allocation3 + $0x20] sm:$0xff] %vm440, 0.0
          %462 = vst.msk [vmem:[#allocation3 + $0x28] sm:$0xff] %vm440, 0.0
          %463 = vst.msk [vmem:[#allocation3 + $0x30] sm:$0xff] %vm440, 0.0
          %464 = vst.msk [vmem:[#allocation3 + $0x38] sm:$0xff] %vm440, 0.0
          %465 = vst.msk [vmem:[#allocation3 + $0x40] sm:$0xff] %vm440, 0.0
          %466 = vst.msk [vmem:[#allocation3 + $0x48] sm:$0xff] %vm440, 0.0
          %467 = vst.msk [vmem:[#allocation3 + $0x50] sm:$0xff] %vm440, 0.0
          %468 = vst.msk [vmem:[#allocation3 + $0x58] sm:$0xff] %vm440, 0.0
          %469 = vst.msk [vmem:[#allocation3 + $0x60] sm:$0xff] %vm440, 0.0
          %470 = vst.msk [vmem:[#allocation3 + $0x68] sm:$0xff] %vm440, 0.0
          %471 = vst.msk [vmem:[#allocation3 + $0x70] sm:$0xff] %vm440, 0.0
          %472 = vst.msk [vmem:[#allocation3 + $0x78] sm:$0xff] %vm440, 0.0
          %vm473 = vcmask 261120
          %474 = vst.msk [vmem:[%s434] sm:$0xff] %vm473, 0.0
          %475 = vst.msk [vmem:[%s434 + $0x8] sm:$0xff] %vm473, 0.0
          %476 = vst.msk [vmem:[%s434 + $0x10] sm:$0xff] %vm473, 0.0
          %477 = vst.msk [vmem:[%s434 + $0x18] sm:$0xff] %vm473, 0.0
          %478 = vst.msk [vmem:[%s434 + $0x20] sm:$0xff] %vm473, 0.0
          %479 = vst.msk [vmem:[%s434 + $0x28] sm:$0xff] %vm473, 0.0
          %480 = vst.msk [vmem:[%s434 + $0x30] sm:$0xff] %vm473, 0.0
          %481 = vst.msk [vmem:[%s434 + $0x38] sm:$0xff] %vm473, 0.0
          %482 = vst.msk [vmem:[%s434 + $0x40] sm:$0xff] %vm473, 0.0
          %483 = vst.msk [vmem:[%s434 + $0x48] sm:$0xff] %vm473, 0.0
          %484 = vst.msk [vmem:[%s434 + $0x50] sm:$0xff] %vm473, 0.0
          %485 = vst.msk [vmem:[%s434 + $0x58] sm:$0xff] %vm473, 0.0
          %486 = vst.msk [vmem:[%s434 + $0x60] sm:$0xff] %vm473, 0.0
          %487 = vst.msk [vmem:[%s434 + $0x68] sm:$0xff] %vm473, 0.0
          %488 = vst.msk [vmem:[%s434 + $0x70] sm:$0xff] %vm473, 0.0
          %489 = vst.msk [vmem:[%s434 + $0x78] sm:$0xff] %vm473, 0.0
        $region82: #{tpu_custom_call.1} parent=73 // pred_fallthru
          _
        %v490 = vld [vmem:[%s326] sm:$0xff]
        %v491 = vld [vmem:[%s326 + $0x8] sm:$0xff]
        %v492 = vld [vmem:[%s395] sm:$0x1]
        %v493 = vmul.f32 %v490, %v490
        %v494 = vmul.f32 %v491, %v491
        %v495 = vsub.f32 0.0, %v493
        %v496 = vsub.f32 0.0, %v494
        %v498 = vperm.slane %v492, 0
        %v500 = vmul.f32 %v495, %v498
        %v501 = vmul.f32 %v496, %v498
        %v502 = vmul.f32 %v490, 2.0
        %v503 = vmul.f32 %v491, 2.0
        %v504 = vmul.f32 %v502, %v498
        %v505 = vmul.f32 %v503, %v498
        %v506 = vld [vmem:[%s404] sm:$0xff]
        %v507 = vld [vmem:[%s404 + $0x8] sm:$0xff]
        %v508 = vld [vmem:[%s404 + $0x10] sm:$0xff]
        %v509 = vld [vmem:[%s404 + $0x18] sm:$0xff]
        %v510 = vld [vmem:[%s404 + $0x20] sm:$0xff]
        %v511 = vld [vmem:[%s404 + $0x28] sm:$0xff]
        %v512 = vld [vmem:[%s404 + $0x30] sm:$0xff]
        %v513 = vld [vmem:[%s404 + $0x38] sm:$0xff]
        %v514 = vld [vmem:[%s404 + $0x40] sm:$0xff]
        %v515 = vld [vmem:[%s404 + $0x48] sm:$0xff]
        %v516 = vld [vmem:[%s404 + $0x50] sm:$0xff]
        %v517 = vld [vmem:[%s404 + $0x58] sm:$0xff]
        %v518 = vld [vmem:[%s404 + $0x60] sm:$0xff]
        %v519 = vld [vmem:[%s404 + $0x68] sm:$0xff]
        %v520 = vld [vmem:[%s404 + $0x70] sm:$0xff]
        %v521 = vld [vmem:[%s404 + $0x78] sm:$0xff]
        %vm522 = vcmask 261120
        %v524 = vsel %vm522, %v506, 0
        %v527 = vsel %vm522, %v507, 0
        %v530 = vsel %vm522, %v508, 0
        %v533 = vsel %vm522, %v509, 0
        %v536 = vsel %vm522, %v510, 0
        %v539 = vsel %vm522, %v511, 0
        %v542 = vsel %vm522, %v512, 0
        %v545 = vsel %vm522, %v513, 0
        %v548 = vsel %vm522, %v514, 0
        %v551 = vsel %vm522, %v515, 0
        %v554 = vsel %vm522, %v516, 0
        %v557 = vsel %vm522, %v517, 0
        %v560 = vsel %vm522, %v518, 0
        %v563 = vsel %vm522, %v519, 0
        %v566 = vsel %vm522, %v520, 0
        %v569 = vsel %vm522, %v521, 0
        %571 = vmatpush.msra.mxu0 0.0
        %572 = vmatpush.msra.mxu0 0.0
        %573 = vmatpush.msra.mxu0 0.0
        %574 = vmatpush.msra.mxu0 0.0
        %575 = vmatpush.msra.mxu0 0.0
        %576 = vmatpush.msra.mxu0 0.0
        %577 = vmatpush.msra.mxu0 0.0
        %578 = vmatpush.msra.mxu0 0.0
        %579 = vmatpush.msra.mxu0 0.0
        %580 = vmatpush.msra.mxu0 0.0
        %581 = vmatpush.msra.mxu0 0.0
        %582 = vmatpush.msra.mxu0 0.0
        %583 = vmatpush.msra.mxu0 %v505
        %584 = vmatpush.msra.mxu0 %v504
        %585 = vmatpush.msra.mxu0 %v501
        %586 = vmatpush.msra.mxu0 %v500
        %587 = vmatmul.f32.gmra.mxu0 %v524
        %v588 = vpop.f32.mrf.mxu0
        %v589 = vadd.f32 0.0, %v588
        %590 = vmatmul.f32.gmra.mxu0 %v527
        %v591 = vpop.f32.mrf.mxu0
        %v592 = vadd.f32 0.0, %v591
        %593 = vmatmul.f32.gmra.mxu0 %v530
        %v594 = vpop.f32.mrf.mxu0
        %v595 = vadd.f32 0.0, %v594
        %596 = vmatmul.f32.gmra.mxu0 %v533
        %v597 = vpop.f32.mrf.mxu0
        %v598 = vadd.f32 0.0, %v597
        %599 = vmatmul.f32.gmra.mxu0 %v536
        %v600 = vpop.f32.mrf.mxu0
        %v601 = vadd.f32 0.0, %v600
        %602 = vmatmul.f32.gmra.mxu0 %v539
        %v603 = vpop.f32.mrf.mxu0
        %v604 = vadd.f32 0.0, %v603
        %605 = vmatmul.f32.gmra.mxu0 %v542
        %v606 = vpop.f32.mrf.mxu0
        %v607 = vadd.f32 0.0, %v606
        %608 = vmatmul.f32.gmra.mxu0 %v545
        %v609 = vpop.f32.mrf.mxu0
        %v610 = vadd.f32 0.0, %v609
        %611 = vmatmul.f32.gmra.mxu0 %v548
        %v612 = vpop.f32.mrf.mxu0
        %v613 = vadd.f32 0.0, %v612
        %614 = vmatmul.f32.gmra.mxu0 %v551
        %v615 = vpop.f32.mrf.mxu0
        %v616 = vadd.f32 0.0, %v615
        %617 = vmatmul.f32.gmra.mxu0 %v554
        %v618 = vpop.f32.mrf.mxu0
        %v619 = vadd.f32 0.0, %v618
        %620 = vmatmul.f32.gmra.mxu0 %v557
        %v621 = vpop.f32.mrf.mxu0
        %v622 = vadd.f32 0.0, %v621
        %623 = vmatmul.f32.gmra.mxu0 %v560
        %v624 = vpop.f32.mrf.mxu0
        %v625 = vadd.f32 0.0, %v624
        %626 = vmatmul.f32.gmra.mxu0 %v563
        %v627 = vpop.f32.mrf.mxu0
        %v628 = vadd.f32 0.0, %v627
        %629 = vmatmul.f32.gmra.mxu0 %v566
        %v630 = vpop.f32.mrf.mxu0
        %v631 = vadd.f32 0.0, %v630
        %632 = vmatmul.f32.gmra.mxu0 %v569
        %v633 = vpop.f32.mrf.mxu0
        %v634 = vadd.f32 0.0, %v633
        %635 = vdwg.mxu0
        %v636 = vld [vmem:[%s414] sm:$0xff]
        %v637 = vld [vmem:[%s414 + $0x8] sm:$0xff]
        %v638 = vld [vmem:[%s414 + $0x10] sm:$0xff]
        %v639 = vld [vmem:[%s414 + $0x18] sm:$0xff]
        %v640 = vld [vmem:[%s414 + $0x20] sm:$0xff]
        %v641 = vld [vmem:[%s414 + $0x28] sm:$0xff]
        %v642 = vld [vmem:[%s414 + $0x30] sm:$0xff]
        %v643 = vld [vmem:[%s414 + $0x38] sm:$0xff]
        %v644 = vld [vmem:[%s414 + $0x40] sm:$0xff]
        %v645 = vld [vmem:[%s414 + $0x48] sm:$0xff]
        %v646 = vld [vmem:[%s414 + $0x50] sm:$0xff]
        %v647 = vld [vmem:[%s414 + $0x58] sm:$0xff]
        %v648 = vld [vmem:[%s414 + $0x60] sm:$0xff]
        %v649 = vld [vmem:[%s414 + $0x68] sm:$0xff]
        %v650 = vld [vmem:[%s414 + $0x70] sm:$0xff]
        %v651 = vld [vmem:[%s414 + $0x78] sm:$0xff]
        %653 = vset.pattern.permute.xlu0 0
        %654 = vperm.xlu0 %653, %v636
        %v655 = vpop.permute.xlu0 %654
        %658 = vset.pattern.permute.xlu0 0
        %659 = vperm.xlu0 %658, %v637
        %v660 = vpop.permute.xlu0 %659
        %663 = vset.pattern.permute.xlu0 0
        %664 = vperm.xlu0 %663, %v638
        %v665 = vpop.permute.xlu0 %664
        %668 = vset.pattern.permute.xlu0 0
        %669 = vperm.xlu0 %668, %v639
        %v670 = vpop.permute.xlu0 %669
        %673 = vset.pattern.permute.xlu0 0
        %674 = vperm.xlu0 %673, %v640
        %v675 = vpop.permute.xlu0 %674
        %678 = vset.pattern.permute.xlu0 0
        %679 = vperm.xlu0 %678, %v641
        %v680 = vpop.permute.xlu0 %679
        %683 = vset.pattern.permute.xlu0 0
        %684 = vperm.xlu0 %683, %v642
        %v685 = vpop.permute.xlu0 %684
        %688 = vset.pattern.permute.xlu0 0
        %689 = vperm.xlu0 %688, %v643
        %v690 = vpop.permute.xlu0 %689
        %693 = vset.pattern.permute.xlu0 0
        %694 = vperm.xlu0 %693, %v644
        %v695 = vpop.permute.xlu0 %694
        %698 = vset.pattern.permute.xlu0 0
        %699 = vperm.xlu0 %698, %v645
        %v700 = vpop.permute.xlu0 %699
        %703 = vset.pattern.permute.xlu0 0
        %704 = vperm.xlu0 %703, %v646
        %v705 = vpop.permute.xlu0 %704
        %708 = vset.pattern.permute.xlu0 0
        %709 = vperm.xlu0 %708, %v647
        %v710 = vpop.permute.xlu0 %709
        %713 = vset.pattern.permute.xlu0 0
        %714 = vperm.xlu0 %713, %v648
        %v715 = vpop.permute.xlu0 %714
        %718 = vset.pattern.permute.xlu0 0
        %719 = vperm.xlu0 %718, %v649
        %v720 = vpop.permute.xlu0 %719
        %723 = vset.pattern.permute.xlu0 0
        %724 = vperm.xlu0 %723, %v650
        %v725 = vpop.permute.xlu0 %724
        %728 = vset.pattern.permute.xlu0 0
        %729 = vperm.xlu0 %728, %v651
        %v730 = vpop.permute.xlu0 %729
        %v732 = vmul.f32 %v655, %v498
        %v733 = vmul.f32 %v660, %v498
        %v734 = vmul.f32 %v665, %v498
        %v735 = vmul.f32 %v670, %v498
        %v736 = vmul.f32 %v675, %v498
        %v737 = vmul.f32 %v680, %v498
        %v738 = vmul.f32 %v685, %v498
        %v739 = vmul.f32 %v690, %v498
        %v740 = vmul.f32 %v695, %v498
        %v741 = vmul.f32 %v700, %v498
        %v742 = vmul.f32 %v705, %v498
        %v743 = vmul.f32 %v710, %v498
        %v744 = vmul.f32 %v715, %v498
        %v745 = vmul.f32 %v720, %v498
        %v746 = vmul.f32 %v725, %v498
        %v747 = vmul.f32 %v730, %v498
        %v748 = vsub.f32 %v589, %v732
        %v749 = vsub.f32 %v592, %v733
        %v750 = vsub.f32 %v595, %v734
        %v751 = vsub.f32 %v598, %v735
        %v752 = vsub.f32 %v601, %v736
        %v753 = vsub.f32 %v604, %v737
        %v754 = vsub.f32 %v607, %v738
        %v755 = vsub.f32 %v610, %v739
        %v756 = vsub.f32 %v613, %v740
        %v757 = vsub.f32 %v616, %v741
        %v758 = vsub.f32 %v619, %v742
        %v759 = vsub.f32 %v622, %v743
        %v760 = vsub.f32 %v625, %v744
        %v761 = vsub.f32 %v628, %v745
        %v762 = vsub.f32 %v631, %v746
        %v763 = vsub.f32 %v634, %v747
        %s764 = smul.u32 %s25, 128
        %v765 = vlaneseq
        %v766 = vand.u32 %v765, 127
        %v767 = vstv %s764
        %v768 = vadd.s32 %v767, %v766
        %s769 = sld [smem:[#allocation5]]
        %v770 = vstv %s769
        %vm771 = vcmp.lt.s32.totalorder %v768, %v770
        %v772 = vsel %vm771, 1, 0
        %vm773 = vcmp.eq.s32.totalorder %v772, 1
        %v774 = vsel %vm773, %v748, -1e+30
        %v775 = vsel %vm773, %v749, -1e+30
        %v776 = vsel %vm773, %v750, -1e+30
        %v777 = vsel %vm773, %v751, -1e+30
        %v778 = vsel %vm773, %v752, -1e+30
        %v779 = vsel %vm773, %v753, -1e+30
        %v780 = vsel %vm773, %v754, -1e+30
        %v781 = vsel %vm773, %v755, -1e+30
        %v782 = vsel %vm773, %v756, -1e+30
        %v783 = vsel %vm773, %v757, -1e+30
        %v784 = vsel %vm773, %v758, -1e+30
        %v785 = vsel %vm773, %v759, -1e+30
        %v786 = vsel %vm773, %v760, -1e+30
        %v787 = vsel %vm773, %v761, -1e+30
        %v788 = vsel %vm773, %v762, -1e+30
        %v789 = vsel %vm773, %v763, -1e+30
        %v790 = vld [vmem:[#allocation2] sm:$0xff]
        %v791 = vld [vmem:[#allocation2 + $0x8] sm:$0xff]
        %v792 = vld [vmem:[#allocation2 + $0x10] sm:$0xff]
        %v793 = vld [vmem:[#allocation2 + $0x18] sm:$0xff]
        %v794 = vld [vmem:[#allocation2 + $0x20] sm:$0xff]
        %v795 = vld [vmem:[#allocation2 + $0x28] sm:$0xff]
        %v796 = vld [vmem:[#allocation2 + $0x30] sm:$0xff]
        %v797 = vld [vmem:[#allocation2 + $0x38] sm:$0xff]
        %v798 = vld [vmem:[#allocation2 + $0x40] sm:$0xff]
        %v799 = vld [vmem:[#allocation2 + $0x48] sm:$0xff]
        %v800 = vld [vmem:[#allocation2 + $0x50] sm:$0xff]
        %v801 = vld [vmem:[#allocation2 + $0x58] sm:$0xff]
        %v802 = vld [vmem:[#allocation2 + $0x60] sm:$0xff]
        %v803 = vld [vmem:[#allocation2 + $0x68] sm:$0xff]
        %v804 = vld [vmem:[#allocation2 + $0x70] sm:$0xff]
        %v805 = vld [vmem:[#allocation2 + $0x78] sm:$0xff]
        %806 = vmax.xlane.f32.xlu0 %v774
        %v807 = vpop.xlane.xlu0 %806
        %808 = vmax.xlane.f32.xlu0 %v775
        %v809 = vpop.xlane.xlu0 %808
        %810 = vmax.xlane.f32.xlu0 %v776
        %v811 = vpop.xlane.xlu0 %810
        %812 = vmax.xlane.f32.xlu0 %v777
        %v813 = vpop.xlane.xlu0 %812
        %814 = vmax.xlane.f32.xlu0 %v778
        %v815 = vpop.xlane.xlu0 %814
        %816 = vmax.xlane.f32.xlu0 %v779
        %v817 = vpop.xlane.xlu0 %816
        %818 = vmax.xlane.f32.xlu0 %v780
        %v819 = vpop.xlane.xlu0 %818
        %820 = vmax.xlane.f32.xlu0 %v781
        %v821 = vpop.xlane.xlu0 %820
        %822 = vmax.xlane.f32.xlu0 %v782
        %v823 = vpop.xlane.xlu0 %822
        %824 = vmax.xlane.f32.xlu0 %v783
        %v825 = vpop.xlane.xlu0 %824
        %826 = vmax.xlane.f32.xlu0 %v784
        %v827 = vpop.xlane.xlu0 %826
        %828 = vmax.xlane.f32.xlu0 %v785
        %v829 = vpop.xlane.xlu0 %828
        %830 = vmax.xlane.f32.xlu0 %v786
        %v831 = vpop.xlane.xlu0 %830
        %832 = vmax.xlane.f32.xlu0 %v787
        %v833 = vpop.xlane.xlu0 %832
        %834 = vmax.xlane.f32.xlu0 %v788
        %v835 = vpop.xlane.xlu0 %834
        %836 = vmax.xlane.f32.xlu0 %v789
        %v837 = vpop.xlane.xlu0 %836
        %v838 = vmax.f32 %v790, %v807
        %v839 = vmax.f32 %v791, %v809
        %v840 = vmax.f32 %v792, %v811
        %v841 = vmax.f32 %v793, %v813
        %v842 = vmax.f32 %v794, %v815
        %v843 = vmax.f32 %v795, %v817
        %v844 = vmax.f32 %v796, %v819
        %v845 = vmax.f32 %v797, %v821
        %v846 = vmax.f32 %v798, %v823
        %v847 = vmax.f32 %v799, %v825
        %v848 = vmax.f32 %v800, %v827
        %v849 = vmax.f32 %v801, %v829
        %v850 = vmax.f32 %v802, %v831
        %v851 = vmax.f32 %v803, %v833
        %v852 = vmax.f32 %v804, %v835
        %v853 = vmax.f32 %v805, %v837
        %v854 = vsub.f32 %v790, %v838
        %v855 = vsub.f32 %v791, %v839
        %v856 = vsub.f32 %v792, %v840
        %v857 = vsub.f32 %v793, %v841
        %v858 = vsub.f32 %v794, %v842
        %v859 = vsub.f32 %v795, %v843
        %v860 = vsub.f32 %v796, %v844
        %v861 = vsub.f32 %v797, %v845
        %v862 = vsub.f32 %v798, %v846
        %v863 = vsub.f32 %v799, %v847
        %v864 = vsub.f32 %v800, %v848
        %v865 = vsub.f32 %v801, %v849
        %v866 = vsub.f32 %v802, %v850
        %v867 = vsub.f32 %v803, %v851
        %v868 = vsub.f32 %v804, %v852
        %v869 = vsub.f32 %v805, %v853
        %v870 = vmul.f32 %v854, 1.442695
        %v871 = vpow.pop %v870
        %v872 = vmul.f32 %v855, 1.442695
        %v873 = vpow.pop %v872
        %v874 = vmul.f32 %v856, 1.442695
        %v875 = vpow.pop %v874
        %v876 = vmul.f32 %v857, 1.442695
        %v877 = vpow.pop %v876
        %v878 = vmul.f32 %v858, 1.442695
        %v879 = vpow.pop %v878
        %v880 = vmul.f32 %v859, 1.442695
        %v881 = vpow.pop %v880
        %v882 = vmul.f32 %v860, 1.442695
        %v883 = vpow.pop %v882
        %v884 = vmul.f32 %v861, 1.442695
        %v885 = vpow.pop %v884
        %v886 = vmul.f32 %v862, 1.442695
        %v887 = vpow.pop %v886
        %v888 = vmul.f32 %v863, 1.442695
        %v889 = vpow.pop %v888
        %v890 = vmul.f32 %v864, 1.442695
        %v891 = vpow.pop %v890
        %v892 = vmul.f32 %v865, 1.442695
        %v893 = vpow.pop %v892
        %v894 = vmul.f32 %v866, 1.442695
        %v895 = vpow.pop %v894
        %v896 = vmul.f32 %v867, 1.442695
        %v897 = vpow.pop %v896
        %v898 = vmul.f32 %v868, 1.442695
        %v899 = vpow.pop %v898
        %v900 = vmul.f32 %v869, 1.442695
        %v901 = vpow.pop %v900
        %903 = vset.pattern.permute.xlu0 0
        %904 = vperm.xlu0 %903, %v838
        %v905 = vpop.permute.xlu0 %904
        %908 = vset.pattern.permute.xlu0 0
        %909 = vperm.xlu0 %908, %v839
        %v910 = vpop.permute.xlu0 %909
        %913 = vset.pattern.permute.xlu0 0
        %914 = vperm.xlu0 %913, %v840
        %v915 = vpop.permute.xlu0 %914
        %918 = vset.pattern.permute.xlu0 0
        %919 = vperm.xlu0 %918, %v841
        %v920 = vpop.permute.xlu0 %919
        %923 = vset.pattern.permute.xlu0 0
        %924 = vperm.xlu0 %923, %v842
        %v925 = vpop.permute.xlu0 %924
        %928 = vset.pattern.permute.xlu0 0
        %929 = vperm.xlu0 %928, %v843
        %v930 = vpop.permute.xlu0 %929
        %933 = vset.pattern.permute.xlu0 0
        %934 = vperm.xlu0 %933, %v844
        %v935 = vpop.permute.xlu0 %934
        %938 = vset.pattern.permute.xlu0 0
        %939 = vperm.xlu0 %938, %v845
        %v940 = vpop.permute.xlu0 %939
        %943 = vset.pattern.permute.xlu0 0
        %944 = vperm.xlu0 %943, %v846
        %v945 = vpop.permute.xlu0 %944
        %948 = vset.pattern.permute.xlu0 0
        %949 = vperm.xlu0 %948, %v847
        %v950 = vpop.permute.xlu0 %949
        %953 = vset.pattern.permute.xlu0 0
        %954 = vperm.xlu0 %953, %v848
        %v955 = vpop.permute.xlu0 %954
        %958 = vset.pattern.permute.xlu0 0
        %959 = vperm.xlu0 %958, %v849
        %v960 = vpop.permute.xlu0 %959
        %963 = vset.pattern.permute.xlu0 0
        %964 = vperm.xlu0 %963, %v850
        %v965 = vpop.permute.xlu0 %964
        %968 = vset.pattern.permute.xlu0 0
        %969 = vperm.xlu0 %968, %v851
        %v970 = vpop.permute.xlu0 %969
        %973 = vset.pattern.permute.xlu0 0
        %974 = vperm.xlu0 %973, %v852
        %v975 = vpop.permute.xlu0 %974
        %978 = vset.pattern.permute.xlu0 0
        %979 = vperm.xlu0 %978, %v853
        %v980 = vpop.permute.xlu0 %979
        %v982 = vsub.f32 %v774, %v905
        %v983 = vsub.f32 %v775, %v910
        %v984 = vsub.f32 %v776, %v915
        %v985 = vsub.f32 %v777, %v920
        %v986 = vsub.f32 %v778, %v925
        %v987 = vsub.f32 %v779, %v930
        %v988 = vsub.f32 %v780, %v935
        %v989 = vsub.f32 %v781, %v940
        %v990 = vsub.f32 %v782, %v945
        %v991 = vsub.f32 %v783, %v950
        %v992 = vsub.f32 %v784, %v955
        %v993 = vsub.f32 %v785, %v960
        %v994 = vsub.f32 %v786, %v965
        %v995 = vsub.f32 %v787, %v970
        %v996 = vsub.f32 %v788, %v975
        %v997 = vsub.f32 %v789, %v980
        %v998 = vmul.f32 %v982, 1.442695
        %v999 = vpow.pop %v998
        %v1000 = vmul.f32 %v983, 1.442695
        %v1001 = vpow.pop %v1000
        %v1002 = vmul.f32 %v984, 1.442695
        %v1003 = vpow.pop %v1002
        %v1004 = vmul.f32 %v985, 1.442695
        %v1005 = vpow.pop %v1004
        %v1006 = vmul.f32 %v986, 1.442695
        %v1007 = vpow.pop %v1006
        %v1008 = vmul.f32 %v987, 1.442695
        %v1009 = vpow.pop %v1008
        %v1010 = vmul.f32 %v988, 1.442695
        %v1011 = vpow.pop %v1010
        %v1012 = vmul.f32 %v989, 1.442695
        %v1013 = vpow.pop %v1012
        %v1014 = vmul.f32 %v990, 1.442695
        %v1015 = vpow.pop %v1014
        %v1016 = vmul.f32 %v991, 1.442695
        %v1017 = vpow.pop %v1016
        %v1018 = vmul.f32 %v992, 1.442695
        %v1019 = vpow.pop %v1018
        %v1020 = vmul.f32 %v993, 1.442695
        %v1021 = vpow.pop %v1020
        %v1022 = vmul.f32 %v994, 1.442695
        %v1023 = vpow.pop %v1022
        %v1024 = vmul.f32 %v995, 1.442695
        %v1025 = vpow.pop %v1024
        %v1026 = vmul.f32 %v996, 1.442695
        %v1027 = vpow.pop %v1026
        %v1028 = vmul.f32 %v997, 1.442695
        %v1029 = vpow.pop %v1028
        %v1030 = vld [vmem:[#allocation3] sm:$0xff]
        %v1031 = vld [vmem:[#allocation3 + $0x8] sm:$0xff]
        %v1032 = vld [vmem:[#allocation3 + $0x10] sm:$0xff]
        %v1033 = vld [vmem:[#allocation3 + $0x18] sm:$0xff]
        %v1034 = vld [vmem:[#allocation3 + $0x20] sm:$0xff]
        %v1035 = vld [vmem:[#allocation3 + $0x28] sm:$0xff]
        %v1036 = vld [vmem:[#allocation3 + $0x30] sm:$0xff]
        %v1037 = vld [vmem:[#allocation3 + $0x38] sm:$0xff]
        %v1038 = vld [vmem:[#allocation3 + $0x40] sm:$0xff]
        %v1039 = vld [vmem:[#allocation3 + $0x48] sm:$0xff]
        %v1040 = vld [vmem:[#allocation3 + $0x50] sm:$0xff]
        %v1041 = vld [vmem:[#allocation3 + $0x58] sm:$0xff]
        %v1042 = vld [vmem:[#allocation3 + $0x60] sm:$0xff]
        %v1043 = vld [vmem:[#allocation3 + $0x68] sm:$0xff]
        %v1044 = vld [vmem:[#allocation3 + $0x70] sm:$0xff]
        %v1045 = vld [vmem:[#allocation3 + $0x78] sm:$0xff]
        %v1046 = vmul.f32 %v871, %v1030
        %v1047 = vmul.f32 %v873, %v1031
        %v1048 = vmul.f32 %v875, %v1032
        %v1049 = vmul.f32 %v877, %v1033
        %v1050 = vmul.f32 %v879, %v1034
        %v1051 = vmul.f32 %v881, %v1035
        %v1052 = vmul.f32 %v883, %v1036
        %v1053 = vmul.f32 %v885, %v1037
        %v1054 = vmul.f32 %v887, %v1038
        %v1055 = vmul.f32 %v889, %v1039
        %v1056 = vmul.f32 %v891, %v1040
        %v1057 = vmul.f32 %v893, %v1041
        %v1058 = vmul.f32 %v895, %v1042
        %v1059 = vmul.f32 %v897, %v1043
        %v1060 = vmul.f32 %v899, %v1044
        %v1061 = vmul.f32 %v901, %v1045
        %1062 = vadd.xlane.f32.xlu0 %v999
        %v1063 = vpop.xlane.xlu0 %1062
        %1064 = vadd.xlane.f32.xlu0 %v1001
        %v1065 = vpop.xlane.xlu0 %1064
        %1066 = vadd.xlane.f32.xlu0 %v1003
        %v1067 = vpop.xlane.xlu0 %1066
        %1068 = vadd.xlane.f32.xlu0 %v1005
        %v1069 = vpop.xlane.xlu0 %1068
        %1070 = vadd.xlane.f32.xlu0 %v1007
        %v1071 = vpop.xlane.xlu0 %1070
        %1072 = vadd.xlane.f32.xlu0 %v1009
        %v1073 = vpop.xlane.xlu0 %1072
        %1074 = vadd.xlane.f32.xlu0 %v1011
        %v1075 = vpop.xlane.xlu0 %1074
        %1076 = vadd.xlane.f32.xlu0 %v1013
        %v1077 = vpop.xlane.xlu0 %1076
        %1078 = vadd.xlane.f32.xlu0 %v1015
        %v1079 = vpop.xlane.xlu0 %1078
        %1080 = vadd.xlane.f32.xlu0 %v1017
        %v1081 = vpop.xlane.xlu0 %1080
        %1082 = vadd.xlane.f32.xlu0 %v1019
        %v1083 = vpop.xlane.xlu0 %1082
        %1084 = vadd.xlane.f32.xlu0 %v1021
        %v1085 = vpop.xlane.xlu0 %1084
        %1086 = vadd.xlane.f32.xlu0 %v1023
        %v1087 = vpop.xlane.xlu0 %1086
        %1088 = vadd.xlane.f32.xlu0 %v1025
        %v1089 = vpop.xlane.xlu0 %1088
        %1090 = vadd.xlane.f32.xlu0 %v1027
        %v1091 = vpop.xlane.xlu0 %1090
        %1092 = vadd.xlane.f32.xlu0 %v1029
        %v1093 = vpop.xlane.xlu0 %1092
        %v1094 = vadd.f32 %v1046, %v1063
        %v1095 = vadd.f32 %v1047, %v1065
        %v1096 = vadd.f32 %v1048, %v1067
        %v1097 = vadd.f32 %v1049, %v1069
        %v1098 = vadd.f32 %v1050, %v1071
        %v1099 = vadd.f32 %v1051, %v1073
        %v1100 = vadd.f32 %v1052, %v1075
        %v1101 = vadd.f32 %v1053, %v1077
        %v1102 = vadd.f32 %v1054, %v1079
        %v1103 = vadd.f32 %v1055, %v1081
        %v1104 = vadd.f32 %v1056, %v1083
        %v1105 = vadd.f32 %v1057, %v1085
        %v1106 = vadd.f32 %v1058, %v1087
        %v1107 = vadd.f32 %v1059, %v1089
        %v1108 = vadd.f32 %v1060, %v1091
        %v1109 = vadd.f32 %v1061, %v1093
        %vm1110 = vcmask 7168
        %1111 = vst.msk [vmem:[#allocation3] sm:$0xff] %vm1110, %v1094
        %1112 = vst.msk [vmem:[#allocation3 + $0x8] sm:$0xff] %vm1110, %v1095
        %1113 = vst.msk [vmem:[#allocation3 + $0x10] sm:$0xff] %vm1110, %v1096
        %1114 = vst.msk [vmem:[#allocation3 + $0x18] sm:$0xff] %vm1110, %v1097
        %1115 = vst.msk [vmem:[#allocation3 + $0x20] sm:$0xff] %vm1110, %v1098
        %1116 = vst.msk [vmem:[#allocation3 + $0x28] sm:$0xff] %vm1110, %v1099
        %1117 = vst.msk [vmem:[#allocation3 + $0x30] sm:$0xff] %vm1110, %v1100
        %1118 = vst.msk [vmem:[#allocation3 + $0x38] sm:$0xff] %vm1110, %v1101
        %1119 = vst.msk [vmem:[#allocation3 + $0x40] sm:$0xff] %vm1110, %v1102
        %1120 = vst.msk [vmem:[#allocation3 + $0x48] sm:$0xff] %vm1110, %v1103
        %1121 = vst.msk [vmem:[#allocation3 + $0x50] sm:$0xff] %vm1110, %v1104
        %1122 = vst.msk [vmem:[#allocation3 + $0x58] sm:$0xff] %vm1110, %v1105
        %1123 = vst.msk [vmem:[#allocation3 + $0x60] sm:$0xff] %vm1110, %v1106
        %1124 = vst.msk [vmem:[#allocation3 + $0x68] sm:$0xff] %vm1110, %v1107
        %1125 = vst.msk [vmem:[#allocation3 + $0x70] sm:$0xff] %vm1110, %v1108
        %1126 = vst.msk [vmem:[#allocation3 + $0x78] sm:$0xff] %vm1110, %v1109
        %1127 = vst.msk [vmem:[#allocation2] sm:$0xff] %vm1110, %v838
        %1128 = vst.msk [vmem:[#allocation2 + $0x8] sm:$0xff] %vm1110, %v839
        %1129 = vst.msk [vmem:[#allocation2 + $0x10] sm:$0xff] %vm1110, %v840
        %1130 = vst.msk [vmem:[#allocation2 + $0x18] sm:$0xff] %vm1110, %v841
        %1131 = vst.msk [vmem:[#allocation2 + $0x20] sm:$0xff] %vm1110, %v842
        %1132 = vst.msk [vmem:[#allocation2 + $0x28] sm:$0xff] %vm1110, %v843
        %1133 = vst.msk [vmem:[#allocation2 + $0x30] sm:$0xff] %vm1110, %v844
        %1134 = vst.msk [vmem:[#allocation2 + $0x38] sm:$0xff] %vm1110, %v845
        %1135 = vst.msk [vmem:[#allocation2 + $0x40] sm:$0xff] %vm1110, %v846
        %1136 = vst.msk [vmem:[#allocation2 + $0x48] sm:$0xff] %vm1110, %v847
        %1137 = vst.msk [vmem:[#allocation2 + $0x50] sm:$0xff] %vm1110, %v848
        %1138 = vst.msk [vmem:[#allocation2 + $0x58] sm:$0xff] %vm1110, %v849
        %1139 = vst.msk [vmem:[#allocation2 + $0x60] sm:$0xff] %vm1110, %v850
        %1140 = vst.msk [vmem:[#allocation2 + $0x68] sm:$0xff] %vm1110, %v851
        %1141 = vst.msk [vmem:[#allocation2 + $0x70] sm:$0xff] %vm1110, %v852
        %1142 = vst.msk [vmem:[#allocation2 + $0x78] sm:$0xff] %vm1110, %v853
        %v1143 = vld [vmem:[%s424] sm:$0xf]
        %v1144 = vld [vmem:[%s424 + $0x4] sm:$0xf]
        %v1145 = vld [vmem:[%s424 + $0x8] sm:$0xf]
        %v1146 = vld [vmem:[%s424 + $0xc] sm:$0xf]
        %v1147 = vld [vmem:[%s424 + $0x10] sm:$0xf]
        %v1148 = vld [vmem:[%s424 + $0x14] sm:$0xf]
        %v1149 = vld [vmem:[%s424 + $0x18] sm:$0xf]
        %v1150 = vld [vmem:[%s424 + $0x1c] sm:$0xf]
        %v1151 = vld [vmem:[%s424 + $0x20] sm:$0xf]
        %v1152 = vld [vmem:[%s424 + $0x24] sm:$0xf]
        %v1153 = vld [vmem:[%s424 + $0x28] sm:$0xf]
        %v1154 = vld [vmem:[%s424 + $0x2c] sm:$0xf]
        %v1155 = vld [vmem:[%s424 + $0x30] sm:$0xf]
        %v1156 = vld [vmem:[%s424 + $0x34] sm:$0xf]
        %v1157 = vld [vmem:[%s424 + $0x38] sm:$0xf]
        %v1158 = vld [vmem:[%s424 + $0x3c] sm:$0xf]
        %v1159 = vpack.c.bf16 %v1001, %v999
        %v1160 = vpack.c.bf16 %v1005, %v1003
        %v1161 = vpack.c.bf16 %v1009, %v1007
        %v1162 = vpack.c.bf16 %v1013, %v1011
        %v1163 = vpack.c.bf16 %v1017, %v1015
        %v1164 = vpack.c.bf16 %v1021, %v1019
        %v1165 = vpack.c.bf16 %v1025, %v1023
        %v1166 = vpack.c.bf16 %v1029, %v1027
        %v1183 = vunpack.c.l.b16 %v1143
        %v1184 = vunpack.c.l.b16 %v1144
        %v1185 = vunpack.c.l.b16 %v1145
        %v1186 = vunpack.c.l.b16 %v1146
        %v1187 = vunpack.c.l.b16 %v1147
        %v1188 = vunpack.c.l.b16 %v1148
        %v1189 = vunpack.c.l.b16 %v1149
        %v1190 = vunpack.c.l.b16 %v1150
        %v1191 = vunpack.c.l.b16 %v1151
        %v1192 = vunpack.c.l.b16 %v1152
        %v1193 = vunpack.c.l.b16 %v1153
        %v1194 = vunpack.c.l.b16 %v1154
        %v1195 = vunpack.c.l.b16 %v1155
        %v1196 = vunpack.c.l.b16 %v1156
        %v1197 = vunpack.c.l.b16 %v1157
        %v1198 = vunpack.c.l.b16 %v1158
        %v1199 = vpack.c.b16 %v1184, %v1183
        %v1200 = vpack.c.b16 %v1186, %v1185
        %v1201 = vpack.c.b16 %v1188, %v1187
        %v1202 = vpack.c.b16 %v1190, %v1189
        %v1203 = vpack.c.b16 %v1192, %v1191
        %v1204 = vpack.c.b16 %v1194, %v1193
        %v1205 = vpack.c.b16 %v1196, %v1195
        %v1206 = vpack.c.b16 %v1198, %v1197
        %1215 = vmatpush.bf16.msra.mxu0 %v1206
        %1216 = vmatpush.bf16.msra.mxu0 %v1205
        %1217 = vmatpush.bf16.msra.mxu0 %v1204
        %1218 = vmatpush.bf16.msra.mxu0 %v1203
        %1219 = vmatpush.bf16.msra.mxu0 %v1202
        %1220 = vmatpush.bf16.msra.mxu0 %v1201
        %1221 = vmatpush.bf16.msra.mxu0 %v1200
        %1222 = vmatpush.bf16.msra.mxu0 %v1199
        %1223 = vmatmul.bf16.gmra.mxu0 %v1159
        %v1224 = vpop.f32.mrf.mxu0
        %v1225 = vadd.f32 0.0, %v1224
        %v1226 = vpop.f32.mrf.mxu0
        %v1227 = vadd.f32 0.0, %v1226
        %1228 = vmatmul.bf16.gmra.mxu0 %v1160
        %v1229 = vpop.f32.mrf.mxu0
        %v1230 = vadd.f32 0.0, %v1229
        %v1231 = vpop.f32.mrf.mxu0
        %v1232 = vadd.f32 0.0, %v1231
        %1233 = vmatmul.bf16.gmra.mxu0 %v1161
        %v1234 = vpop.f32.mrf.mxu0
        %v1235 = vadd.f32 0.0, %v1234
        %v1236 = vpop.f32.mrf.mxu0
        %v1237 = vadd.f32 0.0, %v1236
        %1238 = vmatmul.bf16.gmra.mxu0 %v1162
        %v1239 = vpop.f32.mrf.mxu0
        %v1240 = vadd.f32 0.0, %v1239
        %v1241 = vpop.f32.mrf.mxu0
        %v1242 = vadd.f32 0.0, %v1241
        %1243 = vmatmul.bf16.gmra.mxu0 %v1163
        %v1244 = vpop.f32.mrf.mxu0
        %v1245 = vadd.f32 0.0, %v1244
        %v1246 = vpop.f32.mrf.mxu0
        %v1247 = vadd.f32 0.0, %v1246
        %1248 = vmatmul.bf16.gmra.mxu0 %v1164
        %v1249 = vpop.f32.mrf.mxu0
        %v1250 = vadd.f32 0.0, %v1249
        %v1251 = vpop.f32.mrf.mxu0
        %v1252 = vadd.f32 0.0, %v1251
        %1253 = vmatmul.bf16.gmra.mxu0 %v1165
        %v1254 = vpop.f32.mrf.mxu0
        %v1255 = vadd.f32 0.0, %v1254
        %v1256 = vpop.f32.mrf.mxu0
        %v1257 = vadd.f32 0.0, %v1256
        %1258 = vmatmul.bf16.gmra.mxu0 %v1166
        %v1259 = vpop.f32.mrf.mxu0
        %v1260 = vadd.f32 0.0, %v1259
        %v1261 = vpop.f32.mrf.mxu0
        %v1262 = vadd.f32 0.0, %v1261
        %1263 = vdwg.mxu0
        %v1264 = vld [vmem:[%s434] sm:$0xff]
        %v1265 = vld [vmem:[%s434 + $0x8] sm:$0xff]
        %v1266 = vld [vmem:[%s434 + $0x10] sm:$0xff]
        %v1267 = vld [vmem:[%s434 + $0x18] sm:$0xff]
        %v1268 = vld [vmem:[%s434 + $0x20] sm:$0xff]
        %v1269 = vld [vmem:[%s434 + $0x28] sm:$0xff]
        %v1270 = vld [vmem:[%s434 + $0x30] sm:$0xff]
        %v1271 = vld [vmem:[%s434 + $0x38] sm:$0xff]
        %v1272 = vld [vmem:[%s434 + $0x40] sm:$0xff]
        %v1273 = vld [vmem:[%s434 + $0x48] sm:$0xff]
        %v1274 = vld [vmem:[%s434 + $0x50] sm:$0xff]
        %v1275 = vld [vmem:[%s434 + $0x58] sm:$0xff]
        %v1276 = vld [vmem:[%s434 + $0x60] sm:$0xff]
        %v1277 = vld [vmem:[%s434 + $0x68] sm:$0xff]
        %v1278 = vld [vmem:[%s434 + $0x70] sm:$0xff]
        %v1279 = vld [vmem:[%s434 + $0x78] sm:$0xff]
        %1281 = vset.pattern.permute.xlu0 0
        %1282 = vperm.xlu0 %1281, %v871
        %v1283 = vpop.permute.xlu0 %1282
        %1286 = vset.pattern.permute.xlu0 0
        %1287 = vperm.xlu0 %1286, %v873
        %v1288 = vpop.permute.xlu0 %1287
        %1291 = vset.pattern.permute.xlu0 0
        %1292 = vperm.xlu0 %1291, %v875
        %v1293 = vpop.permute.xlu0 %1292
        %1296 = vset.pattern.permute.xlu0 0
        %1297 = vperm.xlu0 %1296, %v877
        %v1298 = vpop.permute.xlu0 %1297
        %1301 = vset.pattern.permute.xlu0 0
        %1302 = vperm.xlu0 %1301, %v879
        %v1303 = vpop.permute.xlu0 %1302
        %1306 = vset.pattern.permute.xlu0 0
        %1307 = vperm.xlu0 %1306, %v881
        %v1308 = vpop.permute.xlu0 %1307
        %1311 = vset.pattern.permute.xlu0 0
        %1312 = vperm.xlu0 %1311, %v883
        %v1313 = vpop.permute.xlu0 %1312
        %1316 = vset.pattern.permute.xlu0 0
        %1317 = vperm.xlu0 %1316, %v885
        %v1318 = vpop.permute.xlu0 %1317
        %1321 = vset.pattern.permute.xlu0 0
        %1322 = vperm.xlu0 %1321, %v887
        %v1323 = vpop.permute.xlu0 %1322
        %1326 = vset.pattern.permute.xlu0 0
        %1327 = vperm.xlu0 %1326, %v889
        %v1328 = vpop.permute.xlu0 %1327
        %1331 = vset.pattern.permute.xlu0 0
        %1332 = vperm.xlu0 %1331, %v891
        %v1333 = vpop.permute.xlu0 %1332
        %1336 = vset.pattern.permute.xlu0 0
        %1337 = vperm.xlu0 %1336, %v893
        %v1338 = vpop.permute.xlu0 %1337
        %1341 = vset.pattern.permute.xlu0 0
        %1342 = vperm.xlu0 %1341, %v895
        %v1343 = vpop.permute.xlu0 %1342
        %1346 = vset.pattern.permute.xlu0 0
        %1347 = vperm.xlu0 %1346, %v897
        %v1348 = vpop.permute.xlu0 %1347
        %1351 = vset.pattern.permute.xlu0 0
        %1352 = vperm.xlu0 %1351, %v899
        %v1353 = vpop.permute.xlu0 %1352
        %1356 = vset.pattern.permute.xlu0 0
        %1357 = vperm.xlu0 %1356, %v901
        %v1358 = vpop.permute.xlu0 %1357
        %v1360 = vmul.f32 %v1283, %v1264
        %v1361 = vmul.f32 %v1288, %v1265
        %v1362 = vmul.f32 %v1293, %v1266
        %v1363 = vmul.f32 %v1298, %v1267
        %v1364 = vmul.f32 %v1303, %v1268
        %v1365 = vmul.f32 %v1308, %v1269
        %v1366 = vmul.f32 %v1313, %v1270
        %v1367 = vmul.f32 %v1318, %v1271
        %v1368 = vmul.f32 %v1323, %v1272
        %v1369 = vmul.f32 %v1328, %v1273
        %v1370 = vmul.f32 %v1333, %v1274
        %v1371 = vmul.f32 %v1338, %v1275
        %v1372 = vmul.f32 %v1343, %v1276
        %v1373 = vmul.f32 %v1348, %v1277
        %v1374 = vmul.f32 %v1353, %v1278
        %v1375 = vmul.f32 %v1358, %v1279
        %v1376 = vadd.f32 %v1360, %v1225
        %v1377 = vadd.f32 %v1361, %v1227
        %v1378 = vadd.f32 %v1362, %v1230
        %v1379 = vadd.f32 %v1363, %v1232
        %v1380 = vadd.f32 %v1364, %v1235
        %v1381 = vadd.f32 %v1365, %v1237
        %v1382 = vadd.f32 %v1366, %v1240
        %v1383 = vadd.f32 %v1367, %v1242
        %v1384 = vadd.f32 %v1368, %v1245
        %v1385 = vadd.f32 %v1369, %v1247
        %v1386 = vadd.f32 %v1370, %v1250
        %v1387 = vadd.f32 %v1371, %v1252
        %v1388 = vadd.f32 %v1372, %v1255
        %v1389 = vadd.f32 %v1373, %v1257
        %v1390 = vadd.f32 %v1374, %v1260
        %v1391 = vadd.f32 %v1375, %v1262
        %1392 = vst.msk [vmem:[%s434] sm:$0xff] %vm522, %v1376
        %1393 = vst.msk [vmem:[%s434 + $0x8] sm:$0xff] %vm522, %v1377
        %1394 = vst.msk [vmem:[%s434 + $0x10] sm:$0xff] %vm522, %v1378
        %1395 = vst.msk [vmem:[%s434 + $0x18] sm:$0xff] %vm522, %v1379
        %1396 = vst.msk [vmem:[%s434 + $0x20] sm:$0xff] %vm522, %v1380
        %1397 = vst.msk [vmem:[%s434 + $0x28] sm:$0xff] %vm522, %v1381
        %1398 = vst.msk [vmem:[%s434 + $0x30] sm:$0xff] %vm522, %v1382
        %1399 = vst.msk [vmem:[%s434 + $0x38] sm:$0xff] %vm522, %v1383
        %1400 = vst.msk [vmem:[%s434 + $0x40] sm:$0xff] %vm522, %v1384
        %1401 = vst.msk [vmem:[%s434 + $0x48] sm:$0xff] %vm522, %v1385
        %1402 = vst.msk [vmem:[%s434 + $0x50] sm:$0xff] %vm522, %v1386
        %1403 = vst.msk [vmem:[%s434 + $0x58] sm:$0xff] %vm522, %v1387
        %1404 = vst.msk [vmem:[%s434 + $0x60] sm:$0xff] %vm522, %v1388
        %1405 = vst.msk [vmem:[%s434 + $0x68] sm:$0xff] %vm522, %v1389
        %1406 = vst.msk [vmem:[%s434 + $0x70] sm:$0xff] %vm522, %v1390
        %1407 = vst.msk [vmem:[%s434 + $0x78] sm:$0xff] %vm522, %v1391
        %p1408 = scmp.eq.s32.totalorder %s25, 3
        // Predicated region
        $region83: #{tpu_custom_call.1} parent=73 // pred_check
          %p1409 = pneg %p1408
        $region84: #{tpu_custom_call.1} parent=73 // pred_check_branch
          %1411 = sbr.rel (%p1409) target = $region86
        $region85: #{tpu_custom_call.1} parent=73 // pred_region
          %v1412 = vld [vmem:[%s434] sm:$0xff]
          %v1413 = vld [vmem:[%s434 + $0x8] sm:$0xff]
          %v1414 = vld [vmem:[%s434 + $0x10] sm:$0xff]
          %v1415 = vld [vmem:[%s434 + $0x18] sm:$0xff]
          %v1416 = vld [vmem:[%s434 + $0x20] sm:$0xff]
          %v1417 = vld [vmem:[%s434 + $0x28] sm:$0xff]
          %v1418 = vld [vmem:[%s434 + $0x30] sm:$0xff]
          %v1419 = vld [vmem:[%s434 + $0x38] sm:$0xff]
          %v1420 = vld [vmem:[%s434 + $0x40] sm:$0xff]
          %v1421 = vld [vmem:[%s434 + $0x48] sm:$0xff]
          %v1422 = vld [vmem:[%s434 + $0x50] sm:$0xff]
          %v1423 = vld [vmem:[%s434 + $0x58] sm:$0xff]
          %v1424 = vld [vmem:[%s434 + $0x60] sm:$0xff]
          %v1425 = vld [vmem:[%s434 + $0x68] sm:$0xff]
          %v1426 = vld [vmem:[%s434 + $0x70] sm:$0xff]
          %v1427 = vld [vmem:[%s434 + $0x78] sm:$0xff]
          %v1428 = vld [vmem:[#allocation3] sm:$0xff]
          %v1429 = vld [vmem:[#allocation3 + $0x8] sm:$0xff]
          %v1430 = vld [vmem:[#allocation3 + $0x10] sm:$0xff]
          %v1431 = vld [vmem:[#allocation3 + $0x18] sm:$0xff]
          %v1432 = vld [vmem:[#allocation3 + $0x20] sm:$0xff]
          %v1433 = vld [vmem:[#allocation3 + $0x28] sm:$0xff]
          %v1434 = vld [vmem:[#allocation3 + $0x30] sm:$0xff]
          %v1435 = vld [vmem:[#allocation3 + $0x38] sm:$0xff]
          %v1436 = vld [vmem:[#allocation3 + $0x40] sm:$0xff]
          %v1437 = vld [vmem:[#allocation3 + $0x48] sm:$0xff]
          %v1438 = vld [vmem:[#allocation3 + $0x50] sm:$0xff]
          %v1439 = vld [vmem:[#allocation3 + $0x58] sm:$0xff]
          %v1440 = vld [vmem:[#allocation3 + $0x60] sm:$0xff]
          %v1441 = vld [vmem:[#allocation3 + $0x68] sm:$0xff]
          %v1442 = vld [vmem:[#allocation3 + $0x70] sm:$0xff]
          %v1443 = vld [vmem:[#allocation3 + $0x78] sm:$0xff]
          %v1444 = vrcp.pop %v1428
          %v1445 = vrcp.pop %v1429
          %v1446 = vrcp.pop %v1430
          %v1447 = vrcp.pop %v1431
          %v1448 = vrcp.pop %v1432
          %v1449 = vrcp.pop %v1433
          %v1450 = vrcp.pop %v1434
          %v1451 = vrcp.pop %v1435
          %v1452 = vrcp.pop %v1436
          %v1453 = vrcp.pop %v1437
          %v1454 = vrcp.pop %v1438
          %v1455 = vrcp.pop %v1439
          %v1456 = vrcp.pop %v1440
          %v1457 = vrcp.pop %v1441
          %v1458 = vrcp.pop %v1442
          %v1459 = vrcp.pop %v1443
          %1461 = vset.pattern.permute.xlu0 0
          %1462 = vperm.xlu0 %1461, %v1444
          %v1463 = vpop.permute.xlu0 %1462
          %1466 = vset.pattern.permute.xlu0 0
          %1467 = vperm.xlu0 %1466, %v1445
          %v1468 = vpop.permute.xlu0 %1467
          %1471 = vset.pattern.permute.xlu0 0
          %1472 = vperm.xlu0 %1471, %v1446
          %v1473 = vpop.permute.xlu0 %1472
          %1476 = vset.pattern.permute.xlu0 0
          %1477 = vperm.xlu0 %1476, %v1447
          %v1478 = vpop.permute.xlu0 %1477
          %1481 = vset.pattern.permute.xlu0 0
          %1482 = vperm.xlu0 %1481, %v1448
          %v1483 = vpop.permute.xlu0 %1482
          %1486 = vset.pattern.permute.xlu0 0
          %1487 = vperm.xlu0 %1486, %v1449
          %v1488 = vpop.permute.xlu0 %1487
          %1491 = vset.pattern.permute.xlu0 0
          %1492 = vperm.xlu0 %1491, %v1450
          %v1493 = vpop.permute.xlu0 %1492
          %1496 = vset.pattern.permute.xlu0 0
          %1497 = vperm.xlu0 %1496, %v1451
          %v1498 = vpop.permute.xlu0 %1497
          %1501 = vset.pattern.permute.xlu0 0
          %1502 = vperm.xlu0 %1501, %v1452
          %v1503 = vpop.permute.xlu0 %1502
          %1506 = vset.pattern.permute.xlu0 0
          %1507 = vperm.xlu0 %1506, %v1453
          %v1508 = vpop.permute.xlu0 %1507
          %1511 = vset.pattern.permute.xlu0 0
          %1512 = vperm.xlu0 %1511, %v1454
          %v1513 = vpop.permute.xlu0 %1512
          %1516 = vset.pattern.permute.xlu0 0
          %1517 = vperm.xlu0 %1516, %v1455
          %v1518 = vpop.permute.xlu0 %1517
          %1521 = vset.pattern.permute.xlu0 0
          %1522 = vperm.xlu0 %1521, %v1456
          %v1523 = vpop.permute.xlu0 %1522
          %1526 = vset.pattern.permute.xlu0 0
          %1527 = vperm.xlu0 %1526, %v1457
          %v1528 = vpop.permute.xlu0 %1527
          %1531 = vset.pattern.permute.xlu0 0
          %1532 = vperm.xlu0 %1531, %v1458
          %v1533 = vpop.permute.xlu0 %1532
          %1536 = vset.pattern.permute.xlu0 0
          %1537 = vperm.xlu0 %1536, %v1459
          %v1538 = vpop.permute.xlu0 %1537
          %v1540 = vmul.f32 %v1412, %v1463
          %v1541 = vmul.f32 %v1413, %v1468
          %v1542 = vmul.f32 %v1414, %v1473
          %v1543 = vmul.f32 %v1415, %v1478
          %v1544 = vmul.f32 %v1416, %v1483
          %v1545 = vmul.f32 %v1417, %v1488
          %v1546 = vmul.f32 %v1418, %v1493
          %v1547 = vmul.f32 %v1419, %v1498
          %v1548 = vmul.f32 %v1420, %v1503
          %v1549 = vmul.f32 %v1421, %v1508
          %v1550 = vmul.f32 %v1422, %v1513
          %v1551 = vmul.f32 %v1423, %v1518
          %v1552 = vmul.f32 %v1424, %v1523
          %v1553 = vmul.f32 %v1425, %v1528
          %v1554 = vmul.f32 %v1426, %v1533
          %v1555 = vmul.f32 %v1427, %v1538
          %1556 = vst.msk [vmem:[%s434] sm:$0xff] %vm522, %v1540
          %1557 = vst.msk [vmem:[%s434 + $0x8] sm:$0xff] %vm522, %v1541
          %1558 = vst.msk [vmem:[%s434 + $0x10] sm:$0xff] %vm522, %v1542
          %1559 = vst.msk [vmem:[%s434 + $0x18] sm:$0xff] %vm522, %v1543
          %1560 = vst.msk [vmem:[%s434 + $0x20] sm:$0xff] %vm522, %v1544
          %1561 = vst.msk [vmem:[%s434 + $0x28] sm:$0xff] %vm522, %v1545
          %1562 = vst.msk [vmem:[%s434 + $0x30] sm:$0xff] %vm522, %v1546
          %1563 = vst.msk [vmem:[%s434 + $0x38] sm:$0xff] %vm522, %v1547
          %1564 = vst.msk [vmem:[%s434 + $0x40] sm:$0xff] %vm522, %v1548
          %1565 = vst.msk [vmem:[%s434 + $0x48] sm:$0xff] %vm522, %v1549
          %1566 = vst.msk [vmem:[%s434 + $0x50] sm:$0xff] %vm522, %v1550
          %1567 = vst.msk [vmem:[%s434 + $0x58] sm:$0xff] %vm522, %v1551
          %1568 = vst.msk [vmem:[%s434 + $0x60] sm:$0xff] %vm522, %v1552
          %1569 = vst.msk [vmem:[%s434 + $0x68] sm:$0xff] %vm522, %v1553
          %1570 = vst.msk [vmem:[%s434 + $0x70] sm:$0xff] %vm522, %v1554
          %1571 = vst.msk [vmem:[%s434 + $0x78] sm:$0xff] %vm522, %v1555
        $region86: #{tpu_custom_call.1} parent=73 // pred_fallthru
          _
        %s1572 = smul.u32 16, %s24
        %p1573 = scmp.lt.s32.totalorder %s23, 1
        %s1574 = scalar_select %p1573, %s23, 1
        %p1575 = scmp.lt.s32.totalorder %s1572, 31
        %s1576 = scalar_select %p1575, %s1572, 31
        %s1577 = smul.addr %s1574, 32
        %s1578 = sadd.s32 %s1576, %s1577
        %s1579 = smul.addr %s1578, 8
        %s1580 = scalar_lea.vmem %s6, %s1579
        // Predicated region
        $region87: #{tpu_custom_call.1} parent=73 // pred_check
          %p1581 = pneg %p197
        $region88: #{tpu_custom_call.1} parent=73 // pred_check_branch
          %1583 = sbr.rel (%p1581) target = $region90
        $region89: #{tpu_custom_call.1} parent=73 // pred_region
          %s1584 = smul.u32 16, %s24
        $region90: #{tpu_custom_call.1} parent=73 // pred_fallthru
          _
      $region74: #{tpu_custom_call.1} parent=5 // pred_fallthru
        _
      %p1585 = scmp.le.s32.totalorder 2, %s13
      // Predicated region
      $region91: #{tpu_custom_call.1} parent=5 // pred_check
        %p1586 = pneg %p1585
      $region92: #{tpu_custom_call.1} parent=5 // pred_check_branch
        %1588 = sbr.rel (%p1586) target = $region94
      $region93: #{tpu_custom_call.1} parent=5 // pred_region
        %s1589 = ssub.s32 %s13, 2
        // Predicated region
        $region95: #{tpu_custom_call.1} parent=93 // pred_check
          %p1590 = pneg %p203
        $region96: #{tpu_custom_call.1} parent=93 // pred_check_branch
          %1592 = sbr.rel (%p1590) target = $region98
        $region97: #{tpu_custom_call.1} parent=93 // pred_region
          %s1593 = smul.u32 16, %s27
          %p1594 = scmp.lt.s32.totalorder %s26, 1
          %s1595 = scalar_select %p1594, %s26, 1
          %p1596 = scmp.lt.s32.totalorder %s1593, 31
          %s1597 = scalar_select %p1596, %s1593, 31
          %s1598 = smul.addr %s1595, 32
          %s1599 = sadd.s32 %s1597, %s1598
          %s1600 = smul.addr %s1599, 8
          %s1601 = scalar_lea.vmem %s6, %s1600
        $region98: #{tpu_custom_call.1} parent=93 // pred_fallthru
          _
      $region94: #{tpu_custom_call.1} parent=5 // pred_fallthru
        _
    $region6: #{tpu_custom_call.1} parent=1 // loop_footer
      %s17 = sadd.s32 1, %s13
    $region7: #{tpu_custom_call.1} parent=1 // loop_footer_branch
      %12 = sbr.rel target = $region3
    $region8: #{tpu_custom_call.1} parent=1 // loop_exit
      _

</llo_original>
